<compile_context>
chip_gen: v6e
topology: v6e:2x2x1
jax: 0.10.0
libtpu: 0.0.40
codegen_flags: <defaults>
</compile_context>

<pallas_src>
import math
import functools

import numpy as np
import jax
import jax.numpy as jnp
from jax import lax
from jax.experimental import pallas as pl
from jax.experimental.pallas import tpu as pltpu


def _sine_expand_kernel(z_ref, y_ref, x_ref, o_ref, *, P, temperature):
    """Blocks:
       z/y/x_ref : (1, T, S) float32  -- cumsum'ed (+normalized) embeddings, one group
       o_ref     : (1, 1, 3P, S)      -- channel-first output tile for (group, frame)
    """
    t = pl.program_id(1)

    # Per-channel 1/dim_t and phase, built from iota (compile-time formula,
    # no input DMA).  dim_t[c] = temperature ** (2*(c//2)/P);
    # even channel -> sin(v), odd channel -> cos(v) = sin(v + pi/2).
    idx = lax.broadcasted_iota(jnp.int32, (P, 1), 0).astype(jnp.float32)   # (P, 1)
    pair = jnp.floor(idx * 0.5)                                            # c // 2
    inv_dim_t = jnp.exp(pair * (-2.0 * math.log(float(temperature)) / P))  # (P, 1)
    phase = (idx - 2.0 * pair) * (0.5 * math.pi)                           # 0 or pi/2

    def emit(e_ref, c0):
        e = e_ref[0, pl.ds(t, 1), :]                 # (1, S) -- this frame's embedding
        v = e * inv_dim_t + phase                    # (P, S) broadcast: (1,S)*(P,1)+(P,1)
        o_ref[0, 0, c0:c0 + P, :] = jnp.sin(v)       # single phased sin per element

    emit(z_ref, 0)
    emit(y_ref, P)
    emit(x_ref, 2 * P)


def position_embedding_sine_3d(mask, *, num_pos_feats=64, num_frames=36,
                               temperature=10000, normalize=False, scale=None):
    """mask: bool (n, h, w), True == padded.  Returns float32
    (n // num_frames, num_frames, 3*num_pos_feats, h, w)."""
    if scale is not None and normalize is False:
        raise ValueError('normalize should be True if scale is passed')
    if scale is None:
        scale = 2 * math.pi

    n, h, w = mask.shape
    T = num_frames
    Ng = n // T
    P = num_pos_feats
    S = h * w
    assert P % 2 == 0, "num_pos_feats must be even (sin/cos channel pairing)"

    not_mask = (~mask).astype(jnp.float32).reshape(Ng, T, h, w)

    # Cumsums + normalization touch only the 3P-times-smaller embedding tensors,
    # so they stay in XLA (negligible HBM traffic / FLOPs).
    z = jnp.cumsum(not_mask, axis=1)
    y = jnp.cumsum(not_mask, axis=2)
    x = jnp.cumsum(not_mask, axis=3)
    if normalize:
        eps = 1e-6
        z = z / (z[:, -1:, :, :] + eps) * scale
        y = y / (y[:, :, -1:, :] + eps) * scale
        x = x / (x[:, :, :, -1:] + eps) * scale

    # Flatten spatial so the kernel's lane dim is H*W (lane-dense stores).
    z = z.reshape(Ng, T, S)
    y = y.reshape(Ng, T, S)
    x = x.reshape(Ng, T, S)

    kernel = functools.partial(_sine_expand_kernel, P=P,
                               temperature=float(temperature))

    emb_spec = pl.BlockSpec((1, T, S), lambda i, t: (i, 0, 0))   # resident per group

    out = pl.pallas_call(
        kernel,
        out_shape=jax.ShapeDtypeStruct((Ng, T, 3 * P, S), jnp.float32),
        grid=(Ng, T),
        in_specs=[emb_spec, emb_spec, emb_spec],
        out_specs=pl.BlockSpec((1, 1, 3 * P, S), lambda i, t: (i, t, 0, 0)),
        compiler_params=pltpu.CompilerParams(
            dimension_semantics=("parallel", "parallel")),
    )(z, y, x)

    # Free reshape: (Ng, T, 3P, H*W) -> (Ng, T, 3P, H, W); no transpose needed
    # because the kernel already wrote channel-first.
    return out.reshape(Ng, T, 3 * P, h, w)


def _reference(mask, num_pos_feats, num_frames, temperature, normalize, scale):
    """Pure-JAX replica of the PyTorch forward (for verification)."""
    if scale is None:
        scale = 2 * math.pi
    n, h, w = mask.shape
    mask = mask.reshape(n // num_frames, num_frames, h, w)
    not_mask = (~mask).astype(jnp.float32)
    z_embed = jnp.cumsum(not_mask, axis=1)
    y_embed = jnp.cumsum(not_mask, axis=2)
    x_embed = jnp.cumsum(not_mask, axis=3)
    if normalize:
        eps = 1e-6
        z_embed = z_embed / (z_embed[:, -1:, :, :] + eps) * scale
        y_embed = y_embed / (y_embed[:, :, -1:, :] + eps) * scale
        x_embed = x_embed / (x_embed[:, :, :, -1:] + eps) * scale
    dim_t = jnp.arange(num_pos_feats, dtype=jnp.float32)
    dim_t = float(temperature) ** (2.0 * jnp.floor(dim_t / 2.0) / num_pos_feats)

    def interleave(p):
        s = jnp.sin(p[..., 0::2])
        c = jnp.cos(p[..., 1::2])
        return jnp.stack((s, c), axis=5).reshape(*p.shape[:4], -1)

    pos_x = interleave(x_embed[..., None] / dim_t)
    pos_y = interleave(y_embed[..., None] / dim_t)
    pos_z = interleave(z_embed[..., None] / dim_t)
    pos = jnp.concatenate((pos_z, pos_y, pos_x), axis=4)
    return jnp.transpose(pos, (0, 1, 4, 2, 3))


if __name__ == "__main__":
    key = jax.random.PRNGKey(0)

    # Small shapes consistent with the module (n = Ng * num_frames masks of (H, W)).
    num_frames = 4
    Ng = 2
    n = Ng * num_frames
    H = W = 16
    num_pos_feats = 16
    normalize = True

    mask = jax.random.bernoulli(key, 0.3, (n, H, W))   # True = padded

    out = position_embedding_sine_3d(
        mask, num_pos_feats=num_pos_feats, num_frames=num_frames,
        temperature=10000, normalize=normalize, scale=None)
    out = jax.block_until_ready(out)

    ref = _reference(mask, num_pos_feats, num_frames, 10000, normalize, None)
    ref = jax.block_until_ready(ref)

    assert out.shape == (Ng, num_frames, 3 * num_pos_feats, H, W), out.shape
    assert np.allclose(np.asarray(out), np.asarray(ref), atol=1e-4, rtol=1e-5), \
        "Pallas kernel output does not match reference"

    print("KERNEL_OK")
</pallas_src>

<mosaic_0001>
module attributes {stable_mosaic.version = 11 : i64} {
  func.func @_sine_expand_kernel(%arg0: i32, %arg1: i32, %arg2: memref<1x4x256xf32, #tpu.memory_space<vmem>>, %arg3: memref<1x4x256xf32, #tpu.memory_space<vmem>>, %arg4: memref<1x4x256xf32, #tpu.memory_space<vmem>>, %arg5: memref<1x1x48x256xf32, #tpu.memory_space<vmem>>) attributes {dimension_semantics = [#tpu.dimension_semantics<parallel>, #tpu.dimension_semantics<parallel>], iteration_bounds = array<i64: 2, 4>, scalar_prefetch = 0 : i64, scratch_operands = 0 : i64, tpu.core_type = #tpu.core_type<tc>, window_params = [{transform_indices = @transform_0, window_bounds = array<i64: 1, 4, 256>}, {transform_indices = @transform_1, window_bounds = array<i64: 1, 4, 256>}, {transform_indices = @transform_2, window_bounds = array<i64: 1, 4, 256>}, {transform_indices = @transform_3, window_bounds = array<i64: 1, 1, 48, 256>}]} {
    %0 = tpu.iota {dimensions = array<i32: 0>} : vector<16x1xi32>
    %1 = arith.sitofp %0 : vector<16x1xi32> to vector<16x1xf32>
    %cst = arith.constant 5.000000e-01 : f32
    %2 = vector.broadcast %cst : f32 to vector<16x1xf32>
    %3 = arith.mulf %1, %2 : vector<16x1xf32>
    %4 = math.floor %3 : vector<16x1xf32>
    %cst_0 = arith.constant -1.15129256 : f32
    %5 = vector.broadcast %cst_0 : f32 to vector<16x1xf32>
    %6 = arith.mulf %4, %5 : vector<16x1xf32>
    %7 = math.exp %6 : vector<16x1xf32>
    %cst_1 = arith.constant 2.000000e+00 : f32
    %8 = vector.broadcast %cst_1 : f32 to vector<16x1xf32>
    %9 = arith.mulf %8, %4 : vector<16x1xf32>
    %10 = arith.subf %1, %9 : vector<16x1xf32>
    %cst_2 = arith.constant 1.57079637 : f32
    %11 = vector.broadcast %cst_2 : f32 to vector<16x1xf32>
    %12 = arith.mulf %10, %11 : vector<16x1xf32>
    %c0 = arith.constant 0 : index
    %13 = arith.index_cast %arg1 : i32 to index
    %c0_3 = arith.constant 0 : index
    %14 = vector.load %arg2[%c0, %13, %c0_3] : memref<1x4x256xf32, #tpu.memory_space<vmem>>, vector<1x1x256xf32>
    %15 = vector.shape_cast %14 : vector<1x1x256xf32> to vector<1x256xf32>
    %16 = vector.broadcast %15 : vector<1x256xf32> to vector<16x256xf32>
    %17 = vector.broadcast %7 : vector<16x1xf32> to vector<16x256xf32>
    %18 = arith.mulf %16, %17 : vector<16x256xf32>
    %19 = vector.broadcast %12 : vector<16x1xf32> to vector<16x256xf32>
    %20 = arith.addf %18, %19 : vector<16x256xf32>
    %21 = math.sin %20 : vector<16x256xf32>
    %c0_4 = arith.constant 0 : index
    %c0_5 = arith.constant 0 : index
    %c0_6 = arith.constant 0 : index
    %c0_7 = arith.constant 0 : index
    %22 = vector.load %arg5[%c0_4, %c0_5, %c0_6, %c0_7] : memref<1x1x48x256xf32, #tpu.memory_space<vmem>>, vector<1x1x16x256xf32>
    %23 = vector.shape_cast %22 : vector<1x1x16x256xf32> to vector<16x256xf32>
    %24 = vector.shape_cast %21 : vector<16x256xf32> to vector<1x1x16x256xf32>
    tpu.vector_store %arg5[%c0_4, %c0_5, %c0_6, %c0_7], %24 {strides = array<i32>} : memref<1x1x48x256xf32, #tpu.memory_space<vmem>>, vector<1x1x16x256xf32>,
    %c0_8 = arith.constant 0 : index
    %25 = arith.index_cast %arg1 : i32 to index
    %c0_9 = arith.constant 0 : index
    %26 = vector.load %arg3[%c0_8, %25, %c0_9] : memref<1x4x256xf32, #tpu.memory_space<vmem>>, vector<1x1x256xf32>
    %27 = vector.shape_cast %26 : vector<1x1x256xf32> to vector<1x256xf32>
    %28 = vector.broadcast %27 : vector<1x256xf32> to vector<16x256xf32>
    %29 = vector.broadcast %7 : vector<16x1xf32> to vector<16x256xf32>
    %30 = arith.mulf %28, %29 : vector<16x256xf32>
    %31 = vector.broadcast %12 : vector<16x1xf32> to vector<16x256xf32>
    %32 = arith.addf %30, %31 : vector<16x256xf32>
    %33 = math.sin %32 : vector<16x256xf32>
    %c0_10 = arith.constant 0 : index
    %c0_11 = arith.constant 0 : index
    %c16 = arith.constant 16 : index
    %c0_12 = arith.constant 0 : index
    %34 = vector.load %arg5[%c0_10, %c0_11, %c16, %c0_12] : memref<1x1x48x256xf32, #tpu.memory_space<vmem>>, vector<1x1x16x256xf32>
    %35 = vector.shape_cast %34 : vector<1x1x16x256xf32> to vector<16x256xf32>
    %36 = vector.shape_cast %33 : vector<16x256xf32> to vector<1x1x16x256xf32>
    tpu.vector_store %arg5[%c0_10, %c0_11, %c16, %c0_12], %36 {strides = array<i32>} : memref<1x1x48x256xf32, #tpu.memory_space<vmem>>, vector<1x1x16x256xf32>,
    %c0_13 = arith.constant 0 : index
    %37 = arith.index_cast %arg1 : i32 to index
    %c0_14 = arith.constant 0 : index
    %38 = vector.load %arg4[%c0_13, %37, %c0_14] : memref<1x4x256xf32, #tpu.memory_space<vmem>>, vector<1x1x256xf32>
    %39 = vector.shape_cast %38 : vector<1x1x256xf32> to vector<1x256xf32>
    %40 = vector.broadcast %39 : vector<1x256xf32> to vector<16x256xf32>
    %41 = vector.broadcast %7 : vector<16x1xf32> to vector<16x256xf32>
    %42 = arith.mulf %40, %41 : vector<16x256xf32>
    %43 = vector.broadcast %12 : vector<16x1xf32> to vector<16x256xf32>
    %44 = arith.addf %42, %43 : vector<16x256xf32>
    %45 = math.sin %44 : vector<16x256xf32>
    %c0_15 = arith.constant 0 : index
    %c0_16 = arith.constant 0 : index
    %c32 = arith.constant 32 : index
    %c0_17 = arith.constant 0 : index
    %46 = vector.load %arg5[%c0_15, %c0_16, %c32, %c0_17] : memref<1x1x48x256xf32, #tpu.memory_space<vmem>>, vector<1x1x16x256xf32>
    %47 = vector.shape_cast %46 : vector<1x1x16x256xf32> to vector<16x256xf32>
    %48 = vector.shape_cast %45 : vector<16x256xf32> to vector<1x1x16x256xf32>
    tpu.vector_store %arg5[%c0_15, %c0_16, %c32, %c0_17], %48 {strides = array<i32>} : memref<1x1x48x256xf32, #tpu.memory_space<vmem>>, vector<1x1x16x256xf32>,
    return
  }
  func.func @transform_0(%arg0: i32, %arg1: i32) -> (i32, i32, i32) {
    %c0_i32 = arith.constant 0 : i32
    %c0_i32_0 = arith.constant 0 : i32
    %c0_i32_1 = arith.constant 0 : i32
    return %arg0, %c0_i32, %c0_i32_0 : i32, i32, i32
  }
  func.func @transform_1(%arg0: i32, %arg1: i32) -> (i32, i32, i32) {
    %c0_i32 = arith.constant 0 : i32
    %c0_i32_0 = arith.constant 0 : i32
    %c0_i32_1 = arith.constant 0 : i32
    return %arg0, %c0_i32, %c0_i32_0 : i32, i32, i32
  }
  func.func @transform_2(%arg0: i32, %arg1: i32) -> (i32, i32, i32) {
    %c0_i32 = arith.constant 0 : i32
    %c0_i32_0 = arith.constant 0 : i32
    %c0_i32_1 = arith.constant 0 : i32
    return %arg0, %c0_i32, %c0_i32_0 : i32, i32, i32
  }
  func.func @transform_3(%arg0: i32, %arg1: i32) -> (i32, i32, i32, i32) {
    %c0_i32 = arith.constant 0 : i32
    %c0_i32_0 = arith.constant 0 : i32
    %c0_i32_1 = arith.constant 0 : i32
    return %arg0, %arg1, %c0_i32, %c0_i32_0 : i32, i32, i32, i32
  }
}

</mosaic_0001>

<llo_original>
// kernel: tpu_custom_call.1
$region0: #{tpu_custom_call.1}
  #allocation0 [shape = 'u32[]', space=smem, size = 0x4, offset = 0x4, fixed_abs, tag = 'smem constant byte address 0x4 - core index']
  #allocation1 [shape = 'u32[144,128]{1,0:T(1,128)}', space=vmem, size = 0x12000, scoped, tag = 'internal scratch']
  %s0 = inlined_call_operand.hbm [shape: f32[2,4,256], index: 0, kind: input, shape index: {}]
  %s1 = inlined_call_operand.hbm [shape: f32[2,4,256], index: 1, kind: input, shape index: {}]
  %s2 = inlined_call_operand.hbm [shape: f32[2,4,256], index: 2, kind: input, shape index: {}]
  %s3 = inlined_call_operand.hbm [shape: f32[2,4,48,256], index: 3, kind: output, shape index: {}]
  %s4 = sld [smem:[#allocation0]]
  $region57: #{tpu_custom_call.1} parent=0
    _
  %s6 = ssub.s32 1, %s4
  %s7 = scalar_select 0, %s6, %s4
  $region1: #{tpu_custom_call.1} parent=0
    #allocation2 [shape = 'u8[8192]{0}', space=vmem, size = 0x2000, scoped, tag = 'input window, operand 0']
    #allocation3 [shape = 's32[2]{0}', space=sflag, size = 0x8, scoped, tag = 'scoped memory for tpu_custom_call.1']
    #allocation4 [shape = 's32[2]{0}', space=sflag, size = 0x8, scoped, tag = 'scoped memory for tpu_custom_call.1']
    #allocation5 [shape = 'u8[8192]{0}', space=vmem, size = 0x2000, scoped, tag = 'input window, operand 1']
    #allocation6 [shape = 's32[2]{0}', space=sflag, size = 0x8, scoped, tag = 'scoped memory for tpu_custom_call.1']
    #allocation7 [shape = 'u8[8192]{0}', space=vmem, size = 0x2000, scoped, tag = 'input window, operand 2']
    #allocation8 [shape = 'u8[98304]{0}', space=vmem, size = 0x18000, scoped, tag = 'output window, operand 0']
    %8 = vsyncpa [#allocation3], 0
    %s9 = scalar_lea.sflag [#allocation3], 1
    %10 = vsyncpa %s9, 0
    %11 = vsyncpa [#allocation6], 0
    %s12 = scalar_lea.sflag [#allocation6], 1
    %13 = vsyncpa %s12, 0
    %14 = vsyncpa [#allocation4], 0
    %s15 = scalar_lea.sflag [#allocation4], 1
    %16 = vsyncpa %s15, 0
    loop: start=0, step=1, limit=10
    $region2: #{tpu_custom_call.1} parent=1 // loop_pre_header
      _
    $region3: #{tpu_custom_call.1} parent=1 // loop_header
      %s18 = sphi 0, %s22
      %p19 = scmp.ge.s32.totalorder %s18, 10
      %s25 = sphi 0, %s37
      %s26 = sphi 0, %s33
      %s27 = sphi 0, %s25
      %s28 = sphi 0, %s26
      %s29 = sphi 0, %s27
      %s30 = sphi 0, %s28
      %s40 = sphi 0, %s42
      %s43 = sphi 0, %s40
      %s44 = sphi 0, %s43
      %s60 = sphi 0, %s44
      %s66 = sphi 0, %s68
      %s69 = sphi 0, %s66
      %s70 = sphi 0, %s69
      %s86 = sphi 0, %s70
      %s92 = sphi 0, %s94
      %s95 = sphi 0, %s92
      %s96 = sphi 0, %s95
      %s112 = sphi 0, %s96
      %s120 = sphi 0, %s122
      %s123 = sphi 0, %s120
      %s124 = sphi 0, %s123
      %s140 = sphi 0, %s124
    $region4: #{tpu_custom_call.1} parent=1 // loop_header_branch
      %21 = sbr.rel (%p19) target = $region8
    $region5: #{tpu_custom_call.1} parent=1 // loop_body
      %s23 = ssub.s32 %s18, 1
      %s24 = ssub.s32 %s18, 2
      %s31 = sadd.s32 1, %s26
      %p32 = scmp.ge.s32.totalorder %s31, 4
      %s33 = scalar_select %p32, 0, %s31
      %s34 = sadd.s32 1, %s25
      %s35 = scalar_select %p32, %s34, %s25
      %p36 = scmp.ge.s32.totalorder %s35, 2
      %s37 = scalar_select %p36, 0, %s35
      %s38 = ssub.s32 %s25, %s37
      %p39 = scmp.eq.s32.totalorder %s38, 0
      %s41 = sadd.s32 %s40, 1
      %s42 = scalar_select %p39, %s40, %s41
      %p45 = pneg %p39
      %p46 = scmp.eq.s32.totalorder %s18, 7
      %p47 = por %p45, %p46
      %p48 = scmp.ne.s32.totalorder %s40, %s43
      %p49 = scmp.eq.s32.totalorder %s18, 0
      %p50 = por %p48, %p49
      %p51 = scmp.ne.s32.totalorder %s40, %s43
      %p52 = scmp.eq.s32.totalorder %s23, 7
      %p53 = por %p51, %p52
      %p54 = scmp.ne.s32.totalorder %s43, %s44
      %p55 = scmp.eq.s32.totalorder %s23, 0
      %p56 = por %p54, %p55
      %p57 = scmp.ne.s32.totalorder %s43, %s44
      %p58 = scmp.eq.s32.totalorder %s24, 7
      %p59 = por %p57, %p58
      %p61 = scmp.ne.s32.totalorder %s44, %s60
      %p62 = scmp.eq.s32.totalorder %s24, 0
      %p63 = por %p61, %p62
      %s64 = ssub.s32 %s25, %s37
      %p65 = scmp.eq.s32.totalorder %s64, 0
      %s67 = sadd.s32 %s66, 1
      %s68 = scalar_select %p65, %s66, %s67
      %p71 = pneg %p65
      %p72 = scmp.eq.s32.totalorder %s18, 7
      %p73 = por %p71, %p72
      %p74 = scmp.ne.s32.totalorder %s66, %s69
      %p75 = scmp.eq.s32.totalorder %s18, 0
      %p76 = por %p74, %p75
      %p77 = scmp.ne.s32.totalorder %s66, %s69
      %p78 = scmp.eq.s32.totalorder %s23, 7
      %p79 = por %p77, %p78
      %p80 = scmp.ne.s32.totalorder %s69, %s70
      %p81 = scmp.eq.s32.totalorder %s23, 0
      %p82 = por %p80, %p81
      %p83 = scmp.ne.s32.totalorder %s69, %s70
      %p84 = scmp.eq.s32.totalorder %s24, 7
      %p85 = por %p83, %p84
      %p87 = scmp.ne.s32.totalorder %s70, %s86
      %p88 = scmp.eq.s32.totalorder %s24, 0
      %p89 = por %p87, %p88
      %s90 = ssub.s32 %s25, %s37
      %p91 = scmp.eq.s32.totalorder %s90, 0
      %s93 = sadd.s32 %s92, 1
      %s94 = scalar_select %p91, %s92, %s93
      %p97 = pneg %p91
      %p98 = scmp.eq.s32.totalorder %s18, 7
      %p99 = por %p97, %p98
      %p100 = scmp.ne.s32.totalorder %s92, %s95
      %p101 = scmp.eq.s32.totalorder %s18, 0
      %p102 = por %p100, %p101
      %p103 = scmp.ne.s32.totalorder %s92, %s95
      %p104 = scmp.eq.s32.totalorder %s23, 7
      %p105 = por %p103, %p104
      %p106 = scmp.ne.s32.totalorder %s95, %s96
      %p107 = scmp.eq.s32.totalorder %s23, 0
      %p108 = por %p106, %p107
      %p109 = scmp.ne.s32.totalorder %s95, %s96
      %p110 = scmp.eq.s32.totalorder %s24, 7
      %p111 = por %p109, %p110
      %p113 = scmp.ne.s32.totalorder %s96, %s112
      %p114 = scmp.eq.s32.totalorder %s24, 0
      %p115 = por %p113, %p114
      %s116 = ssub.s32 %s25, %s37
      %s117 = ssub.s32 %s26, %s33
      %s118 = sor.u32 %s116, %s117
      %p119 = scmp.eq.s32.totalorder %s118, 0
      %s121 = sadd.s32 %s120, 1
      %s122 = scalar_select %p119, %s120, %s121
      %p125 = pneg %p119
      %p126 = scmp.eq.s32.totalorder %s18, 7
      %p127 = por %p125, %p126
      %p128 = scmp.ne.s32.totalorder %s120, %s123
      %p129 = scmp.eq.s32.totalorder %s18, 0
      %p130 = por %p128, %p129
      %p131 = scmp.ne.s32.totalorder %s120, %s123
      %p132 = scmp.eq.s32.totalorder %s23, 7
      %p133 = por %p131, %p132
      %p134 = scmp.ne.s32.totalorder %s123, %s124
      %p135 = scmp.eq.s32.totalorder %s23, 0
      %p136 = por %p134, %p135
      %p137 = scmp.ne.s32.totalorder %s123, %s124
      %p138 = scmp.eq.s32.totalorder %s24, 7
      %p139 = por %p137, %p138
      %p141 = scmp.ne.s32.totalorder %s124, %s140
      %p142 = scmp.eq.s32.totalorder %s24, 0
      %p143 = por %p141, %p142
      %p144 = scmp.le.s32.totalorder 1, %s18
      %p145 = scmp.lt.s32.totalorder %s18, 9
      %p146 = pnand %p144, %p145
      %p147 = pneg %p146
      // Predicated region
      $region9: #{tpu_custom_call.1} parent=5 // pred_check
        _
      $region10: #{tpu_custom_call.1} parent=5 // pred_check_branch
        %149 = sbr.rel (%p146) target = $region12
      $region11: #{tpu_custom_call.1} parent=5 // pred_region
        %s150 = ssub.s32 %s18, 1
      $region12: #{tpu_custom_call.1} parent=5 // pred_fallthru
        _
      %p151 = scmp.lt.s32.totalorder %s18, 8
      // Predicated region
      $region13: #{tpu_custom_call.1} parent=5 // pred_check
        %p152 = pneg %p151
      $region14: #{tpu_custom_call.1} parent=5 // pred_check_branch
        %154 = sbr.rel (%p152) target = $region16
      $region15: #{tpu_custom_call.1} parent=5 // pred_region
        // Predicated region
        $region17: #{tpu_custom_call.1} parent=15 // pred_check
          %p155 = pneg %p50
        $region18: #{tpu_custom_call.1} parent=15 // pred_check_branch
          %157 = sbr.rel (%p155) target = $region20
        $region19: #{tpu_custom_call.1} parent=15 // pred_region
          %s158 = sand.u32 %s40, 1
          %s159 = scalar_lea.sflag [#allocation3], %s158
          %s160 = sand.u32 %s40, 1
          %s161 = smul.addr %s160, 8
          %s162 = scalar_lea.vmem [#allocation2], %s161
          %s164 = ssub.s32 128, 128
          %165 = vsyncadd %s159, %s164
          %s166 = smul.addr %s25, 2
          %s167 = smul.addr %s166, 64
          %s168 = scalar_lea.hbm %s0, %s167
          %s170 = sshll.u32 %s162, 4
          %s171 = int_to_ptr.vmem [resolvable:$true] %s170
          %173 = dma.hbm_to_vmem [thread:$0]  %s168, 128, %s171, %s159
        $region20: #{tpu_custom_call.1} parent=15 // pred_fallthru
          _
        // Predicated region
        $region21: #{tpu_custom_call.1} parent=15 // pred_check
          %p174 = pneg %p76
        $region22: #{tpu_custom_call.1} parent=15 // pred_check_branch
          %176 = sbr.rel (%p174) target = $region24
        $region23: #{tpu_custom_call.1} parent=15 // pred_region
          %s177 = sand.u32 %s18, 1
          %s178 = scalar_lea.sflag [#allocation6], %s177
          %s179 = sand.u32 %s66, 1
          %s180 = smul.addr %s179, 8
          %s181 = scalar_lea.vmem [#allocation5], %s180
          %s183 = ssub.s32 128, 128
          %184 = vsyncadd %s178, %s183
          %s185 = smul.addr %s25, 2
          %s186 = smul.addr %s185, 64
          %s187 = scalar_lea.hbm %s1, %s186
          %s189 = sshll.u32 %s181, 4
          %s190 = int_to_ptr.vmem [resolvable:$true] %s189
          %192 = dma.hbm_to_vmem [thread:$0]  %s187, 128, %s190, %s178
        $region24: #{tpu_custom_call.1} parent=15 // pred_fallthru
          _
        // Predicated region
        $region25: #{tpu_custom_call.1} parent=15 // pred_check
          %p193 = pneg %p102
        $region26: #{tpu_custom_call.1} parent=15 // pred_check_branch
          %195 = sbr.rel (%p193) target = $region28
        $region27: #{tpu_custom_call.1} parent=15 // pred_region
          %s196 = sand.u32 %s18, 1
          %s197 = scalar_lea.sflag [#allocation6], %s196
          %s198 = sand.u32 %s92, 1
          %s199 = smul.addr %s198, 8
          %s200 = scalar_lea.vmem [#allocation7], %s199
          %s202 = ssub.s32 128, 128
          %203 = vsyncadd %s197, %s202
          %s204 = smul.addr %s25, 2
          %s205 = smul.addr %s204, 64
          %s206 = scalar_lea.hbm %s2, %s205
          %s208 = sshll.u32 %s200, 4
          %s209 = int_to_ptr.vmem [resolvable:$true] %s208
          %211 = dma.hbm_to_vmem [thread:$0]  %s206, 128, %s209, %s197
        $region28: #{tpu_custom_call.1} parent=15 // pred_fallthru
          _
      $region16: #{tpu_custom_call.1} parent=5 // pred_fallthru
        _
      %p212 = scmp.le.s32.totalorder 1, %s18
      %p213 = scmp.lt.s32.totalorder %s18, 9
      %p214 = pnand %p212, %p213
      %p215 = pneg %p214
      // Predicated region
      $region29: #{tpu_custom_call.1} parent=5 // pred_check
        _
      $region30: #{tpu_custom_call.1} parent=5 // pred_check_branch
        %217 = sbr.rel (%p214) target = $region32
      $region31: #{tpu_custom_call.1} parent=5 // pred_region
        %s218 = ssub.s32 %s18, 1
        %s219 = sand.u32 %s43, 1
        %s220 = scalar_lea.sflag [#allocation3], %s219
        %s221 = sand.u32 %s43, 1
        %s222 = smul.addr %s221, 8
        %s223 = scalar_lea.vmem [#allocation2], %s222
        // Predicated region
        $region33: #{tpu_custom_call.1} parent=31 // pred_check
          %p224 = pneg %p56
        $region34: #{tpu_custom_call.1} parent=31 // pred_check_branch
          %226 = sbr.rel (%p224) target = $region36
        $region35: #{tpu_custom_call.1} parent=31 // pred_region
          %227 = dma.done %s220, 128
        $region36: #{tpu_custom_call.1} parent=31 // pred_fallthru
          _
        %s228 = sand.u32 %s23, 1
        %s229 = scalar_lea.sflag [#allocation6], %s228
        %s230 = sand.u32 %s69, 1
        %s231 = smul.addr %s230, 8
        %s232 = scalar_lea.vmem [#allocation5], %s231
        // Predicated region
        $region37: #{tpu_custom_call.1} parent=31 // pred_check
          %p233 = pneg %p82
        $region38: #{tpu_custom_call.1} parent=31 // pred_check_branch
          %235 = sbr.rel (%p233) target = $region40
        $region39: #{tpu_custom_call.1} parent=31 // pred_region
          %236 = dma.done %s229, 128
        $region40: #{tpu_custom_call.1} parent=31 // pred_fallthru
          _
        %s237 = sand.u32 %s23, 1
        %s238 = scalar_lea.sflag [#allocation6], %s237
        %s239 = sand.u32 %s95, 1
        %s240 = smul.addr %s239, 8
        %s241 = scalar_lea.vmem [#allocation7], %s240
        // Predicated region
        $region41: #{tpu_custom_call.1} parent=31 // pred_check
          %p242 = pneg %p108
        $region42: #{tpu_custom_call.1} parent=31 // pred_check_branch
          %244 = sbr.rel (%p242) target = $region44
        $region43: #{tpu_custom_call.1} parent=31 // pred_region
          %245 = dma.done %s238, 128
        $region44: #{tpu_custom_call.1} parent=31 // pred_fallthru
          _
        %s246 = sand.u32 %s43, 1
        %s247 = scalar_lea.sflag [#allocation3], %s246
        %s248 = sand.u32 %s43, 1
        %s249 = smul.addr %s248, 8
        %s250 = scalar_lea.vmem [#allocation2], %s249
        %p251 = pneg %p56
        %p252 = pneg %p53
        %s253 = sand.u32 %s23, 1
        %s254 = scalar_lea.sflag [#allocation6], %s253
        %s255 = sand.u32 %s69, 1
        %s256 = smul.addr %s255, 8
        %s257 = scalar_lea.vmem [#allocation5], %s256
        %p258 = pneg %p82
        %p259 = pneg %p79
        %s260 = sand.u32 %s23, 1
        %s261 = scalar_lea.sflag [#allocation6], %s260
        %s262 = sand.u32 %s95, 1
        %s263 = smul.addr %s262, 8
        %s264 = scalar_lea.vmem [#allocation7], %s263
        %p265 = pneg %p108
        %p266 = pneg %p105
        %p267 = pneg %p136
        %p268 = pneg %p133
        %s269 = sand.u32 %s123, 1
        %s270 = scalar_lea.sflag [#allocation4], %s269
        %s271 = sand.u32 %s123, 1
        %s272 = smul.addr %s271, 96
        %s273 = scalar_lea.vmem [#allocation8], %s272
        %v274 = vlaneseq
        %v275 = vshrl.u32 %v274, 7
        %v276 = vadd.s32 %v275, 8
        %v277 = vcvt.s32.f32 %v275
        %v278 = vcvt.s32.f32 %v276
        %v279 = vmul.f32 %v277, 0.5
        %v280 = vmul.f32 %v278, 0.5
        %v281 = vfloor.f32 %v279
        %v282 = vfloor.f32 %v280
        %v283 = vmul.f32 %v281, -1.1512926
        %v284 = vmul.f32 %v282, -1.1512926
        %v285 = vmul.f32 %v283, 1.442695
        %v286 = vpow.pop %v285
        %v287 = vmul.f32 %v284, 1.442695
        %v288 = vpow.pop %v287
        %v289 = vmul.f32 %v281, 2.0
        %v290 = vmul.f32 %v282, 2.0
        %v291 = vsub.f32 %v277, %v289
        %v292 = vsub.f32 %v278, %v290
        %v293 = vmul.f32 %v291, 1.5707964
        %v294 = vmul.f32 %v292, 1.5707964
        %s295 = sshra.s32 %s28, 2
        %s296 = sand.u32 %s28, 3
        %s297 = sshra.s32 %s28, 2
        %s298 = sand.u32 %s28, 3
        %s299 = smul.u32 %s295, 2
        %s300 = smul.u32 %s299, 4
        %s301 = sadd.s32 %s300, %s298
        %s302 = scalar_lea.vmem %s223, %s301 [#allocation2]
        %v303 = vld [vmem:[%s302] ss:$4 sm:$0x3]
        %v305 = vlaneseq
        %v306 = vshrl.u32 %v305, 7
        %v307 = vsub.s32 0, %v306
        %v308 = vrot.slane %v303, %v307
        %v309 = vlaneseq
        %v310 = vshrl.u32 %v309, 7
        %v311 = vsub.s32 1, %v310
        %v312 = vrot.slane %v303, %v311
        %v315 = vmul.f32 %v308, %v286
        %v316 = vmul.f32 %v312, %v286
        %v317 = vmul.f32 %v308, %v288
        %v318 = vmul.f32 %v312, %v288
        %v319 = vadd.f32 %v315, %v293
        %v320 = vadd.f32 %v316, %v293
        %v321 = vadd.f32 %v317, %v294
        %v322 = vadd.f32 %v318, %v294
        %v323 = vand.u32 2147483647, %v319
        %vm324 = vcmp.le.f32.partialorder %v323, 0.7853982
        %vm325 = vcmp.lt.s32.totalorder %v319, 0
        %v326 = vand.u32 %v319, 2139095040
        %v327 = vshrl.u32 %v326, 23
        %v328 = vsub.s32 %v327, 127
        %v329 = vand.u32 2147483647, %v319
        %v330 = vand.u32 %v329, 8388607
        %v331 = vor.u32 %v330, 8388608
        %v332 = vsub.s32 0, %v331
        %v333 = vadd.s32 %v328, 1
        %vm334 = vcmp.gt.s32.totalorder %v333, 0
        %v335 = vsel %vm334, %v333, 0
        %v336 = vshrl.u32 %v335, 5
        %v337 = vand.u32 %v335, 31
        %v338 = vsub.s32 32, %v337
        %v339 = vshrl.u32 683565275, %v338
        %v340 = vshll.u32 683565275, %v337
        %v341 = vshrl.u32 2475754826, %v338
        %v342 = vor.u32 %v340, %v341
        %v343 = vshll.u32 2475754826, %v337
        %v344 = vshrl.u32 2131351028, %v338
        %v345 = vor.u32 %v343, %v344
        %v346 = vshll.u32 2131351028, %v337
        %v347 = vshrl.u32 2102212464, %v338
        %v348 = vor.u32 %v346, %v347
        %v349 = vshll.u32 2102212464, %v337
        %v350 = vshrl.u32 920167782, %v338
        %v351 = vor.u32 %v349, %v350
        %v352 = vshll.u32 920167782, %v337
        %v353 = vshrl.u32 1326507024, %v338
        %v354 = vor.u32 %v352, %v353
        %vm355 = vcmp.lt.s32.totalorder %v336, 1
        %vm356 = vcmp.lt.s32.totalorder %v336, 2
        %vm357 = vcmp.lt.s32.totalorder %v336, 3
        %vm358 = vcmp.lt.s32.totalorder %v336, 4
        %v359 = vsel %vm355, %v339, %v342
        %v360 = vsel %vm358, %v348, 2102212464
        %v361 = vsel %vm357, %v345, %v360
        %v362 = vsel %vm356, %v359, %v361
        %v363 = vsel %vm355, %v342, %v345
        %v364 = vsel %vm358, %v351, 920167782
        %v365 = vsel %vm357, %v348, %v364
        %v366 = vsel %vm356, %v363, %v365
        %v367 = vsel %vm355, %v345, %v348
        %v368 = vsel %vm358, %v354, 1326507024
        %v369 = vsel %vm357, %v351, %v368
        %v370 = vsel %vm356, %v367, %v369
        %v371 = vshll.u32 %v331, 8
        %v372 = vmul.u32.u64.compose %v371, %v370
        %v373 = vextract.low.u32 %v372
        %v374 = vextract.high.u32 %v372
        %v375 = vmul.u32.u64.compose %v371, %v366
        %v376 = vextract.low.u32 %v375
        %v377 = vextract.high.u32 %v375
        %v378 = vmul.u32 %v371, %v362
        %v379 = vadd.s32 %v374, %v376
        %vm380 = vc.u32 %v374, %v376
        %v381 = vadd.s32 %v377, 1
        %v382 = vsel %vm380, %v381, %v377
        %v383 = vadd.s32 %v378, %v382
        %v384 = vadd.s32 %v383, 536870912
        %v385 = vshrl.u32 %v384, 30
        %v386 = vshll.u32 %v385, 30
        %v387 = vsub.s32 %v383, %v386
        %vm388 = vcmp.lt.s32.totalorder %v387, 0
        %v389 = vsub.s32 0, %v387
        %v390 = vsel %vm388, %v389, %v387
        %v391 = vclz %v390
        %v392 = vsub.s32 %v391, 2
        %vm393 = vcmp.gt.s32.totalorder 0, %v392
        %v394 = vsel %vm393, 0, %v392
        %v395 = vsub.s32 32, %v394
        %v396 = vshll.u32 %v387, %v394
        %v397 = vshrl.u32 %v379, %v395
        %v398 = vor.u32 %v396, %v397
        %v399 = vsub.s32 4294967266, %v394
        %v400 = vadd.s32 %v399, 127
        %v401 = vshll.u32 %v400, 23
        %v402 = vor.u32 4788187, %v401
        %v403 = vand.u32 2147483647, %v402
        %v405 = vcvt.s32.f32 %v398
        %v406 = vmul.f32 %v405, %v403
        %v407 = vxor.u32 %v406, 2147483648
        %v408 = vsel %vm325, %v407, %v406
        %v409 = vsub.s32 4, %v385
        %v410 = vsel %vm325, %v409, %v385
        %v411 = vsel %vm324, %v319, %v408
        %v412 = vsel %vm324, 0, %v410
        %v413 = vcosq.f32.pop %v411
        %v414 = vsinq.f32.pop %v411
        %vm415 = vweird.f32 %v319
        %v416 = vadd.s32 %v412, 3
        %v417 = vand.u32 %v416, 3
        %vm418 = vcmp.lt.s32.totalorder %v417, 2
        %vm419 = vcmp.eq.s32.totalorder %v417, 0
        %v420 = vxor.u32 %v414, 2147483648
        %v421 = vsel %vm419, %v413, %v420
        %vm422 = vcmp.eq.s32.totalorder %v417, 2
        %v423 = vxor.u32 %v413, 2147483648
        %v424 = vsel %vm422, %v423, %v414
        %v425 = vsel %vm418, %v421, %v424
        %v426 = vsel %vm415, nan, %v425
        %v427 = vand.u32 2147483647, %v320
        %vm428 = vcmp.le.f32.partialorder %v427, 0.7853982
        %vm429 = vcmp.lt.s32.totalorder %v320, 0
        %v430 = vand.u32 %v320, 2139095040
        %v431 = vshrl.u32 %v430, 23
        %v432 = vsub.s32 %v431, 127
        %v433 = vand.u32 2147483647, %v320
        %v434 = vand.u32 %v433, 8388607
        %v435 = vor.u32 %v434, 8388608
        %v436 = vsub.s32 0, %v435
        %v437 = vadd.s32 %v432, 1
        %vm438 = vcmp.gt.s32.totalorder %v437, 0
        %v439 = vsel %vm438, %v437, 0
        %v440 = vshrl.u32 %v439, 5
        %v441 = vand.u32 %v439, 31
        %v442 = vsub.s32 32, %v441
        %v443 = vshrl.u32 683565275, %v442
        %v444 = vshll.u32 683565275, %v441
        %v445 = vshrl.u32 2475754826, %v442
        %v446 = vor.u32 %v444, %v445
        %v447 = vshll.u32 2475754826, %v441
        %v448 = vshrl.u32 2131351028, %v442
        %v449 = vor.u32 %v447, %v448
        %v450 = vshll.u32 2131351028, %v441
        %v451 = vshrl.u32 2102212464, %v442
        %v452 = vor.u32 %v450, %v451
        %v453 = vshll.u32 2102212464, %v441
        %v454 = vshrl.u32 920167782, %v442
        %v455 = vor.u32 %v453, %v454
        %v456 = vshll.u32 920167782, %v441
        %v457 = vshrl.u32 1326507024, %v442
        %v458 = vor.u32 %v456, %v457
        %vm459 = vcmp.lt.s32.totalorder %v440, 1
        %vm460 = vcmp.lt.s32.totalorder %v440, 2
        %vm461 = vcmp.lt.s32.totalorder %v440, 3
        %vm462 = vcmp.lt.s32.totalorder %v440, 4
        %v463 = vsel %vm459, %v443, %v446
        %v464 = vsel %vm462, %v452, 2102212464
        %v465 = vsel %vm461, %v449, %v464
        %v466 = vsel %vm460, %v463, %v465
        %v467 = vsel %vm459, %v446, %v449
        %v468 = vsel %vm462, %v455, 920167782
        %v469 = vsel %vm461, %v452, %v468
        %v470 = vsel %vm460, %v467, %v469
        %v471 = vsel %vm459, %v449, %v452
        %v472 = vsel %vm462, %v458, 1326507024
        %v473 = vsel %vm461, %v455, %v472
        %v474 = vsel %vm460, %v471, %v473
        %v475 = vshll.u32 %v435, 8
        %v476 = vmul.u32.u64.compose %v475, %v474
        %v477 = vextract.low.u32 %v476
        %v478 = vextract.high.u32 %v476
        %v479 = vmul.u32.u64.compose %v475, %v470
        %v480 = vextract.low.u32 %v479
        %v481 = vextract.high.u32 %v479
        %v482 = vmul.u32 %v475, %v466
        %v483 = vadd.s32 %v478, %v480
        %vm484 = vc.u32 %v478, %v480
        %v485 = vadd.s32 %v481, 1
        %v486 = vsel %vm484, %v485, %v481
        %v487 = vadd.s32 %v482, %v486
        %v488 = vadd.s32 %v487, 536870912
        %v489 = vshrl.u32 %v488, 30
        %v490 = vshll.u32 %v489, 30
        %v491 = vsub.s32 %v487, %v490
        %vm492 = vcmp.lt.s32.totalorder %v491, 0
        %v493 = vsub.s32 0, %v491
        %v494 = vsel %vm492, %v493, %v491
        %v495 = vclz %v494
        %v496 = vsub.s32 %v495, 2
        %vm497 = vcmp.gt.s32.totalorder 0, %v496
        %v498 = vsel %vm497, 0, %v496
        %v499 = vsub.s32 32, %v498
        %v500 = vshll.u32 %v491, %v498
        %v501 = vshrl.u32 %v483, %v499
        %v502 = vor.u32 %v500, %v501
        %v503 = vsub.s32 4294967266, %v498
        %v504 = vadd.s32 %v503, 127
        %v505 = vshll.u32 %v504, 23
        %v506 = vor.u32 4788187, %v505
        %v507 = vand.u32 2147483647, %v506
        %v509 = vcvt.s32.f32 %v502
        %v510 = vmul.f32 %v509, %v507
        %v511 = vxor.u32 %v510, 2147483648
        %v512 = vsel %vm429, %v511, %v510
        %v513 = vsub.s32 4, %v489
        %v514 = vsel %vm429, %v513, %v489
        %v515 = vsel %vm428, %v320, %v512
        %v516 = vsel %vm428, 0, %v514
        %v517 = vcosq.f32.pop %v515
        %v518 = vsinq.f32.pop %v515
        %vm519 = vweird.f32 %v320
        %v520 = vadd.s32 %v516, 3
        %v521 = vand.u32 %v520, 3
        %vm522 = vcmp.lt.s32.totalorder %v521, 2
        %vm523 = vcmp.eq.s32.totalorder %v521, 0
        %v524 = vxor.u32 %v518, 2147483648
        %v525 = vsel %vm523, %v517, %v524
        %vm526 = vcmp.eq.s32.totalorder %v521, 2
        %v527 = vxor.u32 %v517, 2147483648
        %v528 = vsel %vm526, %v527, %v518
        %v529 = vsel %vm522, %v525, %v528
        %v530 = vsel %vm519, nan, %v529
        %v531 = vand.u32 2147483647, %v321
        %vm532 = vcmp.le.f32.partialorder %v531, 0.7853982
        %vm533 = vcmp.lt.s32.totalorder %v321, 0
        %v534 = vand.u32 %v321, 2139095040
        %v535 = vshrl.u32 %v534, 23
        %v536 = vsub.s32 %v535, 127
        %v537 = vand.u32 2147483647, %v321
        %v538 = vand.u32 %v537, 8388607
        %v539 = vor.u32 %v538, 8388608
        %v540 = vsub.s32 0, %v539
        %v541 = vadd.s32 %v536, 1
        %vm542 = vcmp.gt.s32.totalorder %v541, 0
        %v543 = vsel %vm542, %v541, 0
        %v544 = vshrl.u32 %v543, 5
        %v545 = vand.u32 %v543, 31
        %v546 = vsub.s32 32, %v545
        %v547 = vshrl.u32 683565275, %v546
        %v548 = vshll.u32 683565275, %v545
        %v549 = vshrl.u32 2475754826, %v546
        %v550 = vor.u32 %v548, %v549
        %v551 = vshll.u32 2475754826, %v545
        %v552 = vshrl.u32 2131351028, %v546
        %v553 = vor.u32 %v551, %v552
        %v554 = vshll.u32 2131351028, %v545
        %v555 = vshrl.u32 2102212464, %v546
        %v556 = vor.u32 %v554, %v555
        %v557 = vshll.u32 2102212464, %v545
        %v558 = vshrl.u32 920167782, %v546
        %v559 = vor.u32 %v557, %v558
        %v560 = vshll.u32 920167782, %v545
        %v561 = vshrl.u32 1326507024, %v546
        %v562 = vor.u32 %v560, %v561
        %vm563 = vcmp.lt.s32.totalorder %v544, 1
        %vm564 = vcmp.lt.s32.totalorder %v544, 2
        %vm565 = vcmp.lt.s32.totalorder %v544, 3
        %vm566 = vcmp.lt.s32.totalorder %v544, 4
        %v567 = vsel %vm563, %v547, %v550
        %v568 = vsel %vm566, %v556, 2102212464
        %v569 = vsel %vm565, %v553, %v568
        %v570 = vsel %vm564, %v567, %v569
        %v571 = vsel %vm563, %v550, %v553
        %v572 = vsel %vm566, %v559, 920167782
        %v573 = vsel %vm565, %v556, %v572
        %v574 = vsel %vm564, %v571, %v573
        %v575 = vsel %vm563, %v553, %v556
        %v576 = vsel %vm566, %v562, 1326507024
        %v577 = vsel %vm565, %v559, %v576
        %v578 = vsel %vm564, %v575, %v577
        %v579 = vshll.u32 %v539, 8
        %v580 = vmul.u32.u64.compose %v579, %v578
        %v581 = vextract.low.u32 %v580
        %v582 = vextract.high.u32 %v580
        %v583 = vmul.u32.u64.compose %v579, %v574
        %v584 = vextract.low.u32 %v583
        %v585 = vextract.high.u32 %v583
        %v586 = vmul.u32 %v579, %v570
        %v587 = vadd.s32 %v582, %v584
        %vm588 = vc.u32 %v582, %v584
        %v589 = vadd.s32 %v585, 1
        %v590 = vsel %vm588, %v589, %v585
        %v591 = vadd.s32 %v586, %v590
        %v592 = vadd.s32 %v591, 536870912
        %v593 = vshrl.u32 %v592, 30
        %v594 = vshll.u32 %v593, 30
        %v595 = vsub.s32 %v591, %v594
        %vm596 = vcmp.lt.s32.totalorder %v595, 0
        %v597 = vsub.s32 0, %v595
        %v598 = vsel %vm596, %v597, %v595
        %v599 = vclz %v598
        %v600 = vsub.s32 %v599, 2
        %vm601 = vcmp.gt.s32.totalorder 0, %v600
        %v602 = vsel %vm601, 0, %v600
        %v603 = vsub.s32 32, %v602
        %v604 = vshll.u32 %v595, %v602
        %v605 = vshrl.u32 %v587, %v603
        %v606 = vor.u32 %v604, %v605
        %v607 = vsub.s32 4294967266, %v602
        %v608 = vadd.s32 %v607, 127
        %v609 = vshll.u32 %v608, 23
        %v610 = vor.u32 4788187, %v609
        %v611 = vand.u32 2147483647, %v610
        %v613 = vcvt.s32.f32 %v606
        %v614 = vmul.f32 %v613, %v611
        %v615 = vxor.u32 %v614, 2147483648
        %v616 = vsel %vm533, %v615, %v614
        %v617 = vsub.s32 4, %v593
        %v618 = vsel %vm533, %v617, %v593
        %v619 = vsel %vm532, %v321, %v616
        %v620 = vsel %vm532, 0, %v618
        %v621 = vcosq.f32.pop %v619
        %v622 = vsinq.f32.pop %v619
        %vm623 = vweird.f32 %v321
        %v624 = vadd.s32 %v620, 3
        %v625 = vand.u32 %v624, 3
        %vm626 = vcmp.lt.s32.totalorder %v625, 2
        %vm627 = vcmp.eq.s32.totalorder %v625, 0
        %v628 = vxor.u32 %v622, 2147483648
        %v629 = vsel %vm627, %v621, %v628
        %vm630 = vcmp.eq.s32.totalorder %v625, 2
        %v631 = vxor.u32 %v621, 2147483648
        %v632 = vsel %vm630, %v631, %v622
        %v633 = vsel %vm626, %v629, %v632
        %v634 = vsel %vm623, nan, %v633
        %v635 = vand.u32 2147483647, %v322
        %vm636 = vcmp.le.f32.partialorder %v635, 0.7853982
        %vm637 = vcmp.lt.s32.totalorder %v322, 0
        %v638 = vand.u32 %v322, 2139095040
        %v639 = vshrl.u32 %v638, 23
        %v640 = vsub.s32 %v639, 127
        %v641 = vand.u32 2147483647, %v322
        %v642 = vand.u32 %v641, 8388607
        %v643 = vor.u32 %v642, 8388608
        %v644 = vsub.s32 0, %v643
        %v645 = vadd.s32 %v640, 1
        %vm646 = vcmp.gt.s32.totalorder %v645, 0
        %v647 = vsel %vm646, %v645, 0
        %v648 = vshrl.u32 %v647, 5
        %v649 = vand.u32 %v647, 31
        %v650 = vsub.s32 32, %v649
        %v651 = vshrl.u32 683565275, %v650
        %v652 = vshll.u32 683565275, %v649
        %v653 = vshrl.u32 2475754826, %v650
        %v654 = vor.u32 %v652, %v653
        %v655 = vshll.u32 2475754826, %v649
        %v656 = vshrl.u32 2131351028, %v650
        %v657 = vor.u32 %v655, %v656
        %v658 = vshll.u32 2131351028, %v649
        %v659 = vshrl.u32 2102212464, %v650
        %v660 = vor.u32 %v658, %v659
        %v661 = vshll.u32 2102212464, %v649
        %v662 = vshrl.u32 920167782, %v650
        %v663 = vor.u32 %v661, %v662
        %v664 = vshll.u32 920167782, %v649
        %v665 = vshrl.u32 1326507024, %v650
        %v666 = vor.u32 %v664, %v665
        %vm667 = vcmp.lt.s32.totalorder %v648, 1
        %vm668 = vcmp.lt.s32.totalorder %v648, 2
        %vm669 = vcmp.lt.s32.totalorder %v648, 3
        %vm670 = vcmp.lt.s32.totalorder %v648, 4
        %v671 = vsel %vm667, %v651, %v654
        %v672 = vsel %vm670, %v660, 2102212464
        %v673 = vsel %vm669, %v657, %v672
        %v674 = vsel %vm668, %v671, %v673
        %v675 = vsel %vm667, %v654, %v657
        %v676 = vsel %vm670, %v663, 920167782
        %v677 = vsel %vm669, %v660, %v676
        %v678 = vsel %vm668, %v675, %v677
        %v679 = vsel %vm667, %v657, %v660
        %v680 = vsel %vm670, %v666, 1326507024
        %v681 = vsel %vm669, %v663, %v680
        %v682 = vsel %vm668, %v679, %v681
        %v683 = vshll.u32 %v643, 8
        %v684 = vmul.u32.u64.compose %v683, %v682
        %v685 = vextract.low.u32 %v684
        %v686 = vextract.high.u32 %v684
        %v687 = vmul.u32.u64.compose %v683, %v678
        %v688 = vextract.low.u32 %v687
        %v689 = vextract.high.u32 %v687
        %v690 = vmul.u32 %v683, %v674
        %v691 = vadd.s32 %v686, %v688
        %vm692 = vc.u32 %v686, %v688
        %v693 = vadd.s32 %v689, 1
        %v694 = vsel %vm692, %v693, %v689
        %v695 = vadd.s32 %v690, %v694
        %v696 = vadd.s32 %v695, 536870912
        %v697 = vshrl.u32 %v696, 30
        %v698 = vshll.u32 %v697, 30
        %v699 = vsub.s32 %v695, %v698
        %vm700 = vcmp.lt.s32.totalorder %v699, 0
        %v701 = vsub.s32 0, %v699
        %v702 = vsel %vm700, %v701, %v699
        %v703 = vclz %v702
        %v704 = vsub.s32 %v703, 2
        %vm705 = vcmp.gt.s32.totalorder 0, %v704
        %v706 = vsel %vm705, 0, %v704
        %v707 = vsub.s32 32, %v706
        %v708 = vshll.u32 %v699, %v706
        %v709 = vshrl.u32 %v691, %v707
        %v710 = vor.u32 %v708, %v709
        %v711 = vsub.s32 4294967266, %v706
        %v712 = vadd.s32 %v711, 127
        %v713 = vshll.u32 %v712, 23
        %v714 = vor.u32 4788187, %v713
        %v715 = vand.u32 2147483647, %v714
        %v717 = vcvt.s32.f32 %v710
        %v718 = vmul.f32 %v717, %v715
        %v719 = vxor.u32 %v718, 2147483648
        %v720 = vsel %vm637, %v719, %v718
        %v721 = vsub.s32 4, %v697
        %v722 = vsel %vm637, %v721, %v697
        %v723 = vsel %vm636, %v322, %v720
        %v724 = vsel %vm636, 0, %v722
        %v725 = vcosq.f32.pop %v723
        %v726 = vsinq.f32.pop %v723
        %vm727 = vweird.f32 %v322
        %v728 = vadd.s32 %v724, 3
        %v729 = vand.u32 %v728, 3
        %vm730 = vcmp.lt.s32.totalorder %v729, 2
        %vm731 = vcmp.eq.s32.totalorder %v729, 0
        %v732 = vxor.u32 %v726, 2147483648
        %v733 = vsel %vm731, %v725, %v732
        %vm734 = vcmp.eq.s32.totalorder %v729, 2
        %v735 = vxor.u32 %v725, 2147483648
        %v736 = vsel %vm734, %v735, %v726
        %v737 = vsel %vm730, %v733, %v736
        %v738 = vsel %vm727, nan, %v737
        %739 = vst [vmem:[%s273] sm:$0xff] %v426
        %740 = vst [vmem:[%s273 + $0x8] sm:$0xff] %v530
        %741 = vst [vmem:[%s273 + $0x10] sm:$0xff] %v634
        %742 = vst [vmem:[%s273 + $0x18] sm:$0xff] %v738
        %s743 = scalar_lea.vmem %s232, %s301 [#allocation5]
        %v744 = vld [vmem:[%s743] ss:$4 sm:$0x3]
        %v746 = vlaneseq
        %v747 = vshrl.u32 %v746, 7
        %v748 = vsub.s32 0, %v747
        %v749 = vrot.slane %v744, %v748
        %v750 = vlaneseq
        %v751 = vshrl.u32 %v750, 7
        %v752 = vsub.s32 1, %v751
        %v753 = vrot.slane %v744, %v752
        %v756 = vmul.f32 %v749, %v286
        %v757 = vmul.f32 %v753, %v286
        %v758 = vmul.f32 %v749, %v288
        %v759 = vmul.f32 %v753, %v288
        %v760 = vadd.f32 %v756, %v293
        %v761 = vadd.f32 %v757, %v293
        %v762 = vadd.f32 %v758, %v294
        %v763 = vadd.f32 %v759, %v294
        %v764 = vand.u32 2147483647, %v760
        %vm765 = vcmp.le.f32.partialorder %v764, 0.7853982
        %vm766 = vcmp.lt.s32.totalorder %v760, 0
        %v767 = vand.u32 %v760, 2139095040
        %v768 = vshrl.u32 %v767, 23
        %v769 = vsub.s32 %v768, 127
        %v770 = vand.u32 2147483647, %v760
        %v771 = vand.u32 %v770, 8388607
        %v772 = vor.u32 %v771, 8388608
        %v773 = vsub.s32 0, %v772
        %v774 = vadd.s32 %v769, 1
        %vm775 = vcmp.gt.s32.totalorder %v774, 0
        %v776 = vsel %vm775, %v774, 0
        %v777 = vshrl.u32 %v776, 5
        %v778 = vand.u32 %v776, 31
        %v779 = vsub.s32 32, %v778
        %v780 = vshrl.u32 683565275, %v779
        %v781 = vshll.u32 683565275, %v778
        %v782 = vshrl.u32 2475754826, %v779
        %v783 = vor.u32 %v781, %v782
        %v784 = vshll.u32 2475754826, %v778
        %v785 = vshrl.u32 2131351028, %v779
        %v786 = vor.u32 %v784, %v785
        %v787 = vshll.u32 2131351028, %v778
        %v788 = vshrl.u32 2102212464, %v779
        %v789 = vor.u32 %v787, %v788
        %v790 = vshll.u32 2102212464, %v778
        %v791 = vshrl.u32 920167782, %v779
        %v792 = vor.u32 %v790, %v791
        %v793 = vshll.u32 920167782, %v778
        %v794 = vshrl.u32 1326507024, %v779
        %v795 = vor.u32 %v793, %v794
        %vm796 = vcmp.lt.s32.totalorder %v777, 1
        %vm797 = vcmp.lt.s32.totalorder %v777, 2
        %vm798 = vcmp.lt.s32.totalorder %v777, 3
        %vm799 = vcmp.lt.s32.totalorder %v777, 4
        %v800 = vsel %vm796, %v780, %v783
        %v801 = vsel %vm799, %v789, 2102212464
        %v802 = vsel %vm798, %v786, %v801
        %v803 = vsel %vm797, %v800, %v802
        %v804 = vsel %vm796, %v783, %v786
        %v805 = vsel %vm799, %v792, 920167782
        %v806 = vsel %vm798, %v789, %v805
        %v807 = vsel %vm797, %v804, %v806
        %v808 = vsel %vm796, %v786, %v789
        %v809 = vsel %vm799, %v795, 1326507024
        %v810 = vsel %vm798, %v792, %v809
        %v811 = vsel %vm797, %v808, %v810
        %v812 = vshll.u32 %v772, 8
        %v813 = vmul.u32.u64.compose %v812, %v811
        %v814 = vextract.low.u32 %v813
        %v815 = vextract.high.u32 %v813
        %v816 = vmul.u32.u64.compose %v812, %v807
        %v817 = vextract.low.u32 %v816
        %v818 = vextract.high.u32 %v816
        %v819 = vmul.u32 %v812, %v803
        %v820 = vadd.s32 %v815, %v817
        %vm821 = vc.u32 %v815, %v817
        %v822 = vadd.s32 %v818, 1
        %v823 = vsel %vm821, %v822, %v818
        %v824 = vadd.s32 %v819, %v823
        %v825 = vadd.s32 %v824, 536870912
        %v826 = vshrl.u32 %v825, 30
        %v827 = vshll.u32 %v826, 30
        %v828 = vsub.s32 %v824, %v827
        %vm829 = vcmp.lt.s32.totalorder %v828, 0
        %v830 = vsub.s32 0, %v828
        %v831 = vsel %vm829, %v830, %v828
        %v832 = vclz %v831
        %v833 = vsub.s32 %v832, 2
        %vm834 = vcmp.gt.s32.totalorder 0, %v833
        %v835 = vsel %vm834, 0, %v833
        %v836 = vsub.s32 32, %v835
        %v837 = vshll.u32 %v828, %v835
        %v838 = vshrl.u32 %v820, %v836
        %v839 = vor.u32 %v837, %v838
        %v840 = vsub.s32 4294967266, %v835
        %v841 = vadd.s32 %v840, 127
        %v842 = vshll.u32 %v841, 23
        %v843 = vor.u32 4788187, %v842
        %v844 = vand.u32 2147483647, %v843
        %v846 = vcvt.s32.f32 %v839
        %v847 = vmul.f32 %v846, %v844
        %v848 = vxor.u32 %v847, 2147483648
        %v849 = vsel %vm766, %v848, %v847
        %v850 = vsub.s32 4, %v826
        %v851 = vsel %vm766, %v850, %v826
        %v852 = vsel %vm765, %v760, %v849
        %v853 = vsel %vm765, 0, %v851
        %v854 = vcosq.f32.pop %v852
        %v855 = vsinq.f32.pop %v852
        %vm856 = vweird.f32 %v760
        %v857 = vadd.s32 %v853, 3
        %v858 = vand.u32 %v857, 3
        %vm859 = vcmp.lt.s32.totalorder %v858, 2
        %vm860 = vcmp.eq.s32.totalorder %v858, 0
        %v861 = vxor.u32 %v855, 2147483648
        %v862 = vsel %vm860, %v854, %v861
        %vm863 = vcmp.eq.s32.totalorder %v858, 2
        %v864 = vxor.u32 %v854, 2147483648
        %v865 = vsel %vm863, %v864, %v855
        %v866 = vsel %vm859, %v862, %v865
        %v867 = vsel %vm856, nan, %v866
        %v868 = vand.u32 2147483647, %v761
        %vm869 = vcmp.le.f32.partialorder %v868, 0.7853982
        %vm870 = vcmp.lt.s32.totalorder %v761, 0
        %v871 = vand.u32 %v761, 2139095040
        %v872 = vshrl.u32 %v871, 23
        %v873 = vsub.s32 %v872, 127
        %v874 = vand.u32 2147483647, %v761
        %v875 = vand.u32 %v874, 8388607
        %v876 = vor.u32 %v875, 8388608
        %v877 = vsub.s32 0, %v876
        %v878 = vadd.s32 %v873, 1
        %vm879 = vcmp.gt.s32.totalorder %v878, 0
        %v880 = vsel %vm879, %v878, 0
        %v881 = vshrl.u32 %v880, 5
        %v882 = vand.u32 %v880, 31
        %v883 = vsub.s32 32, %v882
        %v884 = vshrl.u32 683565275, %v883
        %v885 = vshll.u32 683565275, %v882
        %v886 = vshrl.u32 2475754826, %v883
        %v887 = vor.u32 %v885, %v886
        %v888 = vshll.u32 2475754826, %v882
        %v889 = vshrl.u32 2131351028, %v883
        %v890 = vor.u32 %v888, %v889
        %v891 = vshll.u32 2131351028, %v882
        %v892 = vshrl.u32 2102212464, %v883
        %v893 = vor.u32 %v891, %v892
        %v894 = vshll.u32 2102212464, %v882
        %v895 = vshrl.u32 920167782, %v883
        %v896 = vor.u32 %v894, %v895
        %v897 = vshll.u32 920167782, %v882
        %v898 = vshrl.u32 1326507024, %v883
        %v899 = vor.u32 %v897, %v898
        %vm900 = vcmp.lt.s32.totalorder %v881, 1
        %vm901 = vcmp.lt.s32.totalorder %v881, 2
        %vm902 = vcmp.lt.s32.totalorder %v881, 3
        %vm903 = vcmp.lt.s32.totalorder %v881, 4
        %v904 = vsel %vm900, %v884, %v887
        %v905 = vsel %vm903, %v893, 2102212464
        %v906 = vsel %vm902, %v890, %v905
        %v907 = vsel %vm901, %v904, %v906
        %v908 = vsel %vm900, %v887, %v890
        %v909 = vsel %vm903, %v896, 920167782
        %v910 = vsel %vm902, %v893, %v909
        %v911 = vsel %vm901, %v908, %v910
        %v912 = vsel %vm900, %v890, %v893
        %v913 = vsel %vm903, %v899, 1326507024
        %v914 = vsel %vm902, %v896, %v913
        %v915 = vsel %vm901, %v912, %v914
        %v916 = vshll.u32 %v876, 8
        %v917 = vmul.u32.u64.compose %v916, %v915
        %v918 = vextract.low.u32 %v917
        %v919 = vextract.high.u32 %v917
        %v920 = vmul.u32.u64.compose %v916, %v911
        %v921 = vextract.low.u32 %v920
        %v922 = vextract.high.u32 %v920
        %v923 = vmul.u32 %v916, %v907
        %v924 = vadd.s32 %v919, %v921
        %vm925 = vc.u32 %v919, %v921
        %v926 = vadd.s32 %v922, 1
        %v927 = vsel %vm925, %v926, %v922
        %v928 = vadd.s32 %v923, %v927
        %v929 = vadd.s32 %v928, 536870912
        %v930 = vshrl.u32 %v929, 30
        %v931 = vshll.u32 %v930, 30
        %v932 = vsub.s32 %v928, %v931
        %vm933 = vcmp.lt.s32.totalorder %v932, 0
        %v934 = vsub.s32 0, %v932
        %v935 = vsel %vm933, %v934, %v932
        %v936 = vclz %v935
        %v937 = vsub.s32 %v936, 2
        %vm938 = vcmp.gt.s32.totalorder 0, %v937
        %v939 = vsel %vm938, 0, %v937
        %v940 = vsub.s32 32, %v939
        %v941 = vshll.u32 %v932, %v939
        %v942 = vshrl.u32 %v924, %v940
        %v943 = vor.u32 %v941, %v942
        %v944 = vsub.s32 4294967266, %v939
        %v945 = vadd.s32 %v944, 127
        %v946 = vshll.u32 %v945, 23
        %v947 = vor.u32 4788187, %v946
        %v948 = vand.u32 2147483647, %v947
        %v950 = vcvt.s32.f32 %v943
        %v951 = vmul.f32 %v950, %v948
        %v952 = vxor.u32 %v951, 2147483648
        %v953 = vsel %vm870, %v952, %v951
        %v954 = vsub.s32 4, %v930
        %v955 = vsel %vm870, %v954, %v930
        %v956 = vsel %vm869, %v761, %v953
        %v957 = vsel %vm869, 0, %v955
        %v958 = vcosq.f32.pop %v956
        %v959 = vsinq.f32.pop %v956
        %vm960 = vweird.f32 %v761
        %v961 = vadd.s32 %v957, 3
        %v962 = vand.u32 %v961, 3
        %vm963 = vcmp.lt.s32.totalorder %v962, 2
        %vm964 = vcmp.eq.s32.totalorder %v962, 0
        %v965 = vxor.u32 %v959, 2147483648
        %v966 = vsel %vm964, %v958, %v965
        %vm967 = vcmp.eq.s32.totalorder %v962, 2
        %v968 = vxor.u32 %v958, 2147483648
        %v969 = vsel %vm967, %v968, %v959
        %v970 = vsel %vm963, %v966, %v969
        %v971 = vsel %vm960, nan, %v970
        %v972 = vand.u32 2147483647, %v762
        %vm973 = vcmp.le.f32.partialorder %v972, 0.7853982
        %vm974 = vcmp.lt.s32.totalorder %v762, 0
        %v975 = vand.u32 %v762, 2139095040
        %v976 = vshrl.u32 %v975, 23
        %v977 = vsub.s32 %v976, 127
        %v978 = vand.u32 2147483647, %v762
        %v979 = vand.u32 %v978, 8388607
        %v980 = vor.u32 %v979, 8388608
        %v981 = vsub.s32 0, %v980
        %v982 = vadd.s32 %v977, 1
        %vm983 = vcmp.gt.s32.totalorder %v982, 0
        %v984 = vsel %vm983, %v982, 0
        %v985 = vshrl.u32 %v984, 5
        %v986 = vand.u32 %v984, 31
        %v987 = vsub.s32 32, %v986
        %v988 = vshrl.u32 683565275, %v987
        %v989 = vshll.u32 683565275, %v986
        %v990 = vshrl.u32 2475754826, %v987
        %v991 = vor.u32 %v989, %v990
        %v992 = vshll.u32 2475754826, %v986
        %v993 = vshrl.u32 2131351028, %v987
        %v994 = vor.u32 %v992, %v993
        %v995 = vshll.u32 2131351028, %v986
        %v996 = vshrl.u32 2102212464, %v987
        %v997 = vor.u32 %v995, %v996
        %v998 = vshll.u32 2102212464, %v986
        %v999 = vshrl.u32 920167782, %v987
        %v1000 = vor.u32 %v998, %v999
        %v1001 = vshll.u32 920167782, %v986
        %v1002 = vshrl.u32 1326507024, %v987
        %v1003 = vor.u32 %v1001, %v1002
        %vm1004 = vcmp.lt.s32.totalorder %v985, 1
        %vm1005 = vcmp.lt.s32.totalorder %v985, 2
        %vm1006 = vcmp.lt.s32.totalorder %v985, 3
        %vm1007 = vcmp.lt.s32.totalorder %v985, 4
        %v1008 = vsel %vm1004, %v988, %v991
        %v1009 = vsel %vm1007, %v997, 2102212464
        %v1010 = vsel %vm1006, %v994, %v1009
        %v1011 = vsel %vm1005, %v1008, %v1010
        %v1012 = vsel %vm1004, %v991, %v994
        %v1013 = vsel %vm1007, %v1000, 920167782
        %v1014 = vsel %vm1006, %v997, %v1013
        %v1015 = vsel %vm1005, %v1012, %v1014
        %v1016 = vsel %vm1004, %v994, %v997
        %v1017 = vsel %vm1007, %v1003, 1326507024
        %v1018 = vsel %vm1006, %v1000, %v1017
        %v1019 = vsel %vm1005, %v1016, %v1018
        %v1020 = vshll.u32 %v980, 8
        %v1021 = vmul.u32.u64.compose %v1020, %v1019
        %v1022 = vextract.low.u32 %v1021
        %v1023 = vextract.high.u32 %v1021
        %v1024 = vmul.u32.u64.compose %v1020, %v1015
        %v1025 = vextract.low.u32 %v1024
        %v1026 = vextract.high.u32 %v1024
        %v1027 = vmul.u32 %v1020, %v1011
        %v1028 = vadd.s32 %v1023, %v1025
        %vm1029 = vc.u32 %v1023, %v1025
        %v1030 = vadd.s32 %v1026, 1
        %v1031 = vsel %vm1029, %v1030, %v1026
        %v1032 = vadd.s32 %v1027, %v1031
        %v1033 = vadd.s32 %v1032, 536870912
        %v1034 = vshrl.u32 %v1033, 30
        %v1035 = vshll.u32 %v1034, 30
        %v1036 = vsub.s32 %v1032, %v1035
        %vm1037 = vcmp.lt.s32.totalorder %v1036, 0
        %v1038 = vsub.s32 0, %v1036
        %v1039 = vsel %vm1037, %v1038, %v1036
        %v1040 = vclz %v1039
        %v1041 = vsub.s32 %v1040, 2
        %vm1042 = vcmp.gt.s32.totalorder 0, %v1041
        %v1043 = vsel %vm1042, 0, %v1041
        %v1044 = vsub.s32 32, %v1043
        %v1045 = vshll.u32 %v1036, %v1043
        %v1046 = vshrl.u32 %v1028, %v1044
        %v1047 = vor.u32 %v1045, %v1046
        %v1048 = vsub.s32 4294967266, %v1043
        %v1049 = vadd.s32 %v1048, 127
        %v1050 = vshll.u32 %v1049, 23
        %v1051 = vor.u32 4788187, %v1050
        %v1052 = vand.u32 2147483647, %v1051
        %v1054 = vcvt.s32.f32 %v1047
        %v1055 = vmul.f32 %v1054, %v1052
        %v1056 = vxor.u32 %v1055, 2147483648
        %v1057 = vsel %vm974, %v1056, %v1055
        %v1058 = vsub.s32 4, %v1034
        %v1059 = vsel %vm974, %v1058, %v1034
        %v1060 = vsel %vm973, %v762, %v1057
        %v1061 = vsel %vm973, 0, %v1059
        %v1062 = vcosq.f32.pop %v1060
        %v1063 = vsinq.f32.pop %v1060
        %vm1064 = vweird.f32 %v762
        %v1065 = vadd.s32 %v1061, 3
        %v1066 = vand.u32 %v1065, 3
        %vm1067 = vcmp.lt.s32.totalorder %v1066, 2
        %vm1068 = vcmp.eq.s32.totalorder %v1066, 0
        %v1069 = vxor.u32 %v1063, 2147483648
        %v1070 = vsel %vm1068, %v1062, %v1069
        %vm1071 = vcmp.eq.s32.totalorder %v1066, 2
        %v1072 = vxor.u32 %v1062, 2147483648
        %v1073 = vsel %vm1071, %v1072, %v1063
        %v1074 = vsel %vm1067, %v1070, %v1073
        %v1075 = vsel %vm1064, nan, %v1074
        %v1076 = vand.u32 2147483647, %v763
        %vm1077 = vcmp.le.f32.partialorder %v1076, 0.7853982
        %vm1078 = vcmp.lt.s32.totalorder %v763, 0
        %v1079 = vand.u32 %v763, 2139095040
        %v1080 = vshrl.u32 %v1079, 23
        %v1081 = vsub.s32 %v1080, 127
        %v1082 = vand.u32 2147483647, %v763
        %v1083 = vand.u32 %v1082, 8388607
        %v1084 = vor.u32 %v1083, 8388608
        %v1085 = vsub.s32 0, %v1084
        %v1086 = vadd.s32 %v1081, 1
        %vm1087 = vcmp.gt.s32.totalorder %v1086, 0
        %v1088 = vsel %vm1087, %v1086, 0
        %v1089 = vshrl.u32 %v1088, 5
        %v1090 = vand.u32 %v1088, 31
        %v1091 = vsub.s32 32, %v1090
        %v1092 = vshrl.u32 683565275, %v1091
        %v1093 = vshll.u32 683565275, %v1090
        %v1094 = vshrl.u32 2475754826, %v1091
        %v1095 = vor.u32 %v1093, %v1094
        %v1096 = vshll.u32 2475754826, %v1090
        %v1097 = vshrl.u32 2131351028, %v1091
        %v1098 = vor.u32 %v1096, %v1097
        %v1099 = vshll.u32 2131351028, %v1090
        %v1100 = vshrl.u32 2102212464, %v1091
        %v1101 = vor.u32 %v1099, %v1100
        %v1102 = vshll.u32 2102212464, %v1090
        %v1103 = vshrl.u32 920167782, %v1091
        %v1104 = vor.u32 %v1102, %v1103
        %v1105 = vshll.u32 920167782, %v1090
        %v1106 = vshrl.u32 1326507024, %v1091
        %v1107 = vor.u32 %v1105, %v1106
        %vm1108 = vcmp.lt.s32.totalorder %v1089, 1
        %vm1109 = vcmp.lt.s32.totalorder %v1089, 2
        %vm1110 = vcmp.lt.s32.totalorder %v1089, 3
        %vm1111 = vcmp.lt.s32.totalorder %v1089, 4
        %v1112 = vsel %vm1108, %v1092, %v1095
        %v1113 = vsel %vm1111, %v1101, 2102212464
        %v1114 = vsel %vm1110, %v1098, %v1113
        %v1115 = vsel %vm1109, %v1112, %v1114
        %v1116 = vsel %vm1108, %v1095, %v1098
        %v1117 = vsel %vm1111, %v1104, 920167782
        %v1118 = vsel %vm1110, %v1101, %v1117
        %v1119 = vsel %vm1109, %v1116, %v1118
        %v1120 = vsel %vm1108, %v1098, %v1101
        %v1121 = vsel %vm1111, %v1107, 1326507024
        %v1122 = vsel %vm1110, %v1104, %v1121
        %v1123 = vsel %vm1109, %v1120, %v1122
        %v1124 = vshll.u32 %v1084, 8
        %v1125 = vmul.u32.u64.compose %v1124, %v1123
        %v1126 = vextract.low.u32 %v1125
        %v1127 = vextract.high.u32 %v1125
        %v1128 = vmul.u32.u64.compose %v1124, %v1119
        %v1129 = vextract.low.u32 %v1128
        %v1130 = vextract.high.u32 %v1128
        %v1131 = vmul.u32 %v1124, %v1115
        %v1132 = vadd.s32 %v1127, %v1129
        %vm1133 = vc.u32 %v1127, %v1129
        %v1134 = vadd.s32 %v1130, 1
        %v1135 = vsel %vm1133, %v1134, %v1130
        %v1136 = vadd.s32 %v1131, %v1135
        %v1137 = vadd.s32 %v1136, 536870912
        %v1138 = vshrl.u32 %v1137, 30
        %v1139 = vshll.u32 %v1138, 30
        %v1140 = vsub.s32 %v1136, %v1139
        %vm1141 = vcmp.lt.s32.totalorder %v1140, 0
        %v1142 = vsub.s32 0, %v1140
        %v1143 = vsel %vm1141, %v1142, %v1140
        %v1144 = vclz %v1143
        %v1145 = vsub.s32 %v1144, 2
        %vm1146 = vcmp.gt.s32.totalorder 0, %v1145
        %v1147 = vsel %vm1146, 0, %v1145
        %v1148 = vsub.s32 32, %v1147
        %v1149 = vshll.u32 %v1140, %v1147
        %v1150 = vshrl.u32 %v1132, %v1148
        %v1151 = vor.u32 %v1149, %v1150
        %v1152 = vsub.s32 4294967266, %v1147
        %v1153 = vadd.s32 %v1152, 127
        %v1154 = vshll.u32 %v1153, 23
        %v1155 = vor.u32 4788187, %v1154
        %v1156 = vand.u32 2147483647, %v1155
        %v1158 = vcvt.s32.f32 %v1151
        %v1159 = vmul.f32 %v1158, %v1156
        %v1160 = vxor.u32 %v1159, 2147483648
        %v1161 = vsel %vm1078, %v1160, %v1159
        %v1162 = vsub.s32 4, %v1138
        %v1163 = vsel %vm1078, %v1162, %v1138
        %v1164 = vsel %vm1077, %v763, %v1161
        %v1165 = vsel %vm1077, 0, %v1163
        %v1166 = vcosq.f32.pop %v1164
        %v1167 = vsinq.f32.pop %v1164
        %vm1168 = vweird.f32 %v763
        %v1169 = vadd.s32 %v1165, 3
        %v1170 = vand.u32 %v1169, 3
        %vm1171 = vcmp.lt.s32.totalorder %v1170, 2
        %vm1172 = vcmp.eq.s32.totalorder %v1170, 0
        %v1173 = vxor.u32 %v1167, 2147483648
        %v1174 = vsel %vm1172, %v1166, %v1173
        %vm1175 = vcmp.eq.s32.totalorder %v1170, 2
        %v1176 = vxor.u32 %v1166, 2147483648
        %v1177 = vsel %vm1175, %v1176, %v1167
        %v1178 = vsel %vm1171, %v1174, %v1177
        %v1179 = vsel %vm1168, nan, %v1178
        %1180 = vst [vmem:[%s273 + $0x20] sm:$0xff] %v867
        %1181 = vst [vmem:[%s273 + $0x28] sm:$0xff] %v971
        %1182 = vst [vmem:[%s273 + $0x30] sm:$0xff] %v1075
        %1183 = vst [vmem:[%s273 + $0x38] sm:$0xff] %v1179
        %s1184 = scalar_lea.vmem %s241, %s301 [#allocation7]
        %v1185 = vld [vmem:[%s1184] ss:$4 sm:$0x3]
        %v1187 = vlaneseq
        %v1188 = vshrl.u32 %v1187, 7
        %v1189 = vsub.s32 0, %v1188
        %v1190 = vrot.slane %v1185, %v1189
        %v1191 = vlaneseq
        %v1192 = vshrl.u32 %v1191, 7
        %v1193 = vsub.s32 1, %v1192
        %v1194 = vrot.slane %v1185, %v1193
        %v1197 = vmul.f32 %v1190, %v286
        %v1198 = vmul.f32 %v1194, %v286
        %v1199 = vmul.f32 %v1190, %v288
        %v1200 = vmul.f32 %v1194, %v288
        %v1201 = vadd.f32 %v1197, %v293
        %v1202 = vadd.f32 %v1198, %v293
        %v1203 = vadd.f32 %v1199, %v294
        %v1204 = vadd.f32 %v1200, %v294
        %v1205 = vand.u32 2147483647, %v1201
        %vm1206 = vcmp.le.f32.partialorder %v1205, 0.7853982
        %vm1207 = vcmp.lt.s32.totalorder %v1201, 0
        %v1208 = vand.u32 %v1201, 2139095040
        %v1209 = vshrl.u32 %v1208, 23
        %v1210 = vsub.s32 %v1209, 127
        %v1211 = vand.u32 2147483647, %v1201
        %v1212 = vand.u32 %v1211, 8388607
        %v1213 = vor.u32 %v1212, 8388608
        %v1214 = vsub.s32 0, %v1213
        %v1215 = vadd.s32 %v1210, 1
        %vm1216 = vcmp.gt.s32.totalorder %v1215, 0
        %v1217 = vsel %vm1216, %v1215, 0
        %v1218 = vshrl.u32 %v1217, 5
        %v1219 = vand.u32 %v1217, 31
        %v1220 = vsub.s32 32, %v1219
        %v1221 = vshrl.u32 683565275, %v1220
        %v1222 = vshll.u32 683565275, %v1219
        %v1223 = vshrl.u32 2475754826, %v1220
        %v1224 = vor.u32 %v1222, %v1223
        %v1225 = vshll.u32 2475754826, %v1219
        %v1226 = vshrl.u32 2131351028, %v1220
        %v1227 = vor.u32 %v1225, %v1226
        %v1228 = vshll.u32 2131351028, %v1219
        %v1229 = vshrl.u32 2102212464, %v1220
        %v1230 = vor.u32 %v1228, %v1229
        %v1231 = vshll.u32 2102212464, %v1219
        %v1232 = vshrl.u32 920167782, %v1220
        %v1233 = vor.u32 %v1231, %v1232
        %v1234 = vshll.u32 920167782, %v1219
        %v1235 = vshrl.u32 1326507024, %v1220
        %v1236 = vor.u32 %v1234, %v1235
        %vm1237 = vcmp.lt.s32.totalorder %v1218, 1
        %vm1238 = vcmp.lt.s32.totalorder %v1218, 2
        %vm1239 = vcmp.lt.s32.totalorder %v1218, 3
        %vm1240 = vcmp.lt.s32.totalorder %v1218, 4
        %v1241 = vsel %vm1237, %v1221, %v1224
        %v1242 = vsel %vm1240, %v1230, 2102212464
        %v1243 = vsel %vm1239, %v1227, %v1242
        %v1244 = vsel %vm1238, %v1241, %v1243
        %v1245 = vsel %vm1237, %v1224, %v1227
        %v1246 = vsel %vm1240, %v1233, 920167782
        %v1247 = vsel %vm1239, %v1230, %v1246
        %v1248 = vsel %vm1238, %v1245, %v1247
        %v1249 = vsel %vm1237, %v1227, %v1230
        %v1250 = vsel %vm1240, %v1236, 1326507024
        %v1251 = vsel %vm1239, %v1233, %v1250
        %v1252 = vsel %vm1238, %v1249, %v1251
        %v1253 = vshll.u32 %v1213, 8
        %v1254 = vmul.u32.u64.compose %v1253, %v1252
        %v1255 = vextract.low.u32 %v1254
        %v1256 = vextract.high.u32 %v1254
        %v1257 = vmul.u32.u64.compose %v1253, %v1248
        %v1258 = vextract.low.u32 %v1257
        %v1259 = vextract.high.u32 %v1257
        %v1260 = vmul.u32 %v1253, %v1244
        %v1261 = vadd.s32 %v1256, %v1258
        %vm1262 = vc.u32 %v1256, %v1258
        %v1263 = vadd.s32 %v1259, 1
        %v1264 = vsel %vm1262, %v1263, %v1259
        %v1265 = vadd.s32 %v1260, %v1264
        %v1266 = vadd.s32 %v1265, 536870912
        %v1267 = vshrl.u32 %v1266, 30
        %v1268 = vshll.u32 %v1267, 30
        %v1269 = vsub.s32 %v1265, %v1268
        %vm1270 = vcmp.lt.s32.totalorder %v1269, 0
        %v1271 = vsub.s32 0, %v1269
        %v1272 = vsel %vm1270, %v1271, %v1269
        %v1273 = vclz %v1272
        %v1274 = vsub.s32 %v1273, 2
        %vm1275 = vcmp.gt.s32.totalorder 0, %v1274
        %v1276 = vsel %vm1275, 0, %v1274
        %v1277 = vsub.s32 32, %v1276
        %v1278 = vshll.u32 %v1269, %v1276
        %v1279 = vshrl.u32 %v1261, %v1277
        %v1280 = vor.u32 %v1278, %v1279
        %v1281 = vsub.s32 4294967266, %v1276
        %v1282 = vadd.s32 %v1281, 127
        %v1283 = vshll.u32 %v1282, 23
        %v1284 = vor.u32 4788187, %v1283
        %v1285 = vand.u32 2147483647, %v1284
        %v1287 = vcvt.s32.f32 %v1280
        %v1288 = vmul.f32 %v1287, %v1285
        %v1289 = vxor.u32 %v1288, 2147483648
        %v1290 = vsel %vm1207, %v1289, %v1288
        %v1291 = vsub.s32 4, %v1267
        %v1292 = vsel %vm1207, %v1291, %v1267
        %v1293 = vsel %vm1206, %v1201, %v1290
        %v1294 = vsel %vm1206, 0, %v1292
        %v1295 = vcosq.f32.pop %v1293
        %v1296 = vsinq.f32.pop %v1293
        %vm1297 = vweird.f32 %v1201
        %v1298 = vadd.s32 %v1294, 3
        %v1299 = vand.u32 %v1298, 3
        %vm1300 = vcmp.lt.s32.totalorder %v1299, 2
        %vm1301 = vcmp.eq.s32.totalorder %v1299, 0
        %v1302 = vxor.u32 %v1296, 2147483648
        %v1303 = vsel %vm1301, %v1295, %v1302
        %vm1304 = vcmp.eq.s32.totalorder %v1299, 2
        %v1305 = vxor.u32 %v1295, 2147483648
        %v1306 = vsel %vm1304, %v1305, %v1296
        %v1307 = vsel %vm1300, %v1303, %v1306
        %v1308 = vsel %vm1297, nan, %v1307
        %v1309 = vand.u32 2147483647, %v1202
        %vm1310 = vcmp.le.f32.partialorder %v1309, 0.7853982
        %vm1311 = vcmp.lt.s32.totalorder %v1202, 0
        %v1312 = vand.u32 %v1202, 2139095040
        %v1313 = vshrl.u32 %v1312, 23
        %v1314 = vsub.s32 %v1313, 127
        %v1315 = vand.u32 2147483647, %v1202
        %v1316 = vand.u32 %v1315, 8388607
        %v1317 = vor.u32 %v1316, 8388608
        %v1318 = vsub.s32 0, %v1317
        %v1319 = vadd.s32 %v1314, 1
        %vm1320 = vcmp.gt.s32.totalorder %v1319, 0
        %v1321 = vsel %vm1320, %v1319, 0
        %v1322 = vshrl.u32 %v1321, 5
        %v1323 = vand.u32 %v1321, 31
        %v1324 = vsub.s32 32, %v1323
        %v1325 = vshrl.u32 683565275, %v1324
        %v1326 = vshll.u32 683565275, %v1323
        %v1327 = vshrl.u32 2475754826, %v1324
        %v1328 = vor.u32 %v1326, %v1327
        %v1329 = vshll.u32 2475754826, %v1323
        %v1330 = vshrl.u32 2131351028, %v1324
        %v1331 = vor.u32 %v1329, %v1330
        %v1332 = vshll.u32 2131351028, %v1323
        %v1333 = vshrl.u32 2102212464, %v1324
        %v1334 = vor.u32 %v1332, %v1333
        %v1335 = vshll.u32 2102212464, %v1323
        %v1336 = vshrl.u32 920167782, %v1324
        %v1337 = vor.u32 %v1335, %v1336
        %v1338 = vshll.u32 920167782, %v1323
        %v1339 = vshrl.u32 1326507024, %v1324
        %v1340 = vor.u32 %v1338, %v1339
        %vm1341 = vcmp.lt.s32.totalorder %v1322, 1
        %vm1342 = vcmp.lt.s32.totalorder %v1322, 2
        %vm1343 = vcmp.lt.s32.totalorder %v1322, 3
        %vm1344 = vcmp.lt.s32.totalorder %v1322, 4
        %v1345 = vsel %vm1341, %v1325, %v1328
        %v1346 = vsel %vm1344, %v1334, 2102212464
        %v1347 = vsel %vm1343, %v1331, %v1346
        %v1348 = vsel %vm1342, %v1345, %v1347
        %v1349 = vsel %vm1341, %v1328, %v1331
        %v1350 = vsel %vm1344, %v1337, 920167782
        %v1351 = vsel %vm1343, %v1334, %v1350
        %v1352 = vsel %vm1342, %v1349, %v1351
        %v1353 = vsel %vm1341, %v1331, %v1334
        %v1354 = vsel %vm1344, %v1340, 1326507024
        %v1355 = vsel %vm1343, %v1337, %v1354
        %v1356 = vsel %vm1342, %v1353, %v1355
        %v1357 = vshll.u32 %v1317, 8
        %v1358 = vmul.u32.u64.compose %v1357, %v1356
        %v1359 = vextract.low.u32 %v1358
        %v1360 = vextract.high.u32 %v1358
        %v1361 = vmul.u32.u64.compose %v1357, %v1352
        %v1362 = vextract.low.u32 %v1361
        %v1363 = vextract.high.u32 %v1361
        %v1364 = vmul.u32 %v1357, %v1348
        %v1365 = vadd.s32 %v1360, %v1362
        %vm1366 = vc.u32 %v1360, %v1362
        %v1367 = vadd.s32 %v1363, 1
        %v1368 = vsel %vm1366, %v1367, %v1363
        %v1369 = vadd.s32 %v1364, %v1368
        %v1370 = vadd.s32 %v1369, 536870912
        %v1371 = vshrl.u32 %v1370, 30
        %v1372 = vshll.u32 %v1371, 30
        %v1373 = vsub.s32 %v1369, %v1372
        %vm1374 = vcmp.lt.s32.totalorder %v1373, 0
        %v1375 = vsub.s32 0, %v1373
        %v1376 = vsel %vm1374, %v1375, %v1373
        %v1377 = vclz %v1376
        %v1378 = vsub.s32 %v1377, 2
        %vm1379 = vcmp.gt.s32.totalorder 0, %v1378
        %v1380 = vsel %vm1379, 0, %v1378
        %v1381 = vsub.s32 32, %v1380
        %v1382 = vshll.u32 %v1373, %v1380
        %v1383 = vshrl.u32 %v1365, %v1381
        %v1384 = vor.u32 %v1382, %v1383
        %v1385 = vsub.s32 4294967266, %v1380
        %v1386 = vadd.s32 %v1385, 127
        %v1387 = vshll.u32 %v1386, 23
        %v1388 = vor.u32 4788187, %v1387
        %v1389 = vand.u32 2147483647, %v1388
        %v1391 = vcvt.s32.f32 %v1384
        %v1392 = vmul.f32 %v1391, %v1389
        %v1393 = vxor.u32 %v1392, 2147483648
        %v1394 = vsel %vm1311, %v1393, %v1392
        %v1395 = vsub.s32 4, %v1371
        %v1396 = vsel %vm1311, %v1395, %v1371
        %v1397 = vsel %vm1310, %v1202, %v1394
        %v1398 = vsel %vm1310, 0, %v1396
        %v1399 = vcosq.f32.pop %v1397
        %v1400 = vsinq.f32.pop %v1397
        %vm1401 = vweird.f32 %v1202
        %v1402 = vadd.s32 %v1398, 3
        %v1403 = vand.u32 %v1402, 3
        %vm1404 = vcmp.lt.s32.totalorder %v1403, 2
        %vm1405 = vcmp.eq.s32.totalorder %v1403, 0
        %v1406 = vxor.u32 %v1400, 2147483648
        %v1407 = vsel %vm1405, %v1399, %v1406
        %vm1408 = vcmp.eq.s32.totalorder %v1403, 2
        %v1409 = vxor.u32 %v1399, 2147483648
        %v1410 = vsel %vm1408, %v1409, %v1400
        %v1411 = vsel %vm1404, %v1407, %v1410
        %v1412 = vsel %vm1401, nan, %v1411
        %v1413 = vand.u32 2147483647, %v1203
        %vm1414 = vcmp.le.f32.partialorder %v1413, 0.7853982
        %vm1415 = vcmp.lt.s32.totalorder %v1203, 0
        %v1416 = vand.u32 %v1203, 2139095040
        %v1417 = vshrl.u32 %v1416, 23
        %v1418 = vsub.s32 %v1417, 127
        %v1419 = vand.u32 2147483647, %v1203
        %v1420 = vand.u32 %v1419, 8388607
        %v1421 = vor.u32 %v1420, 8388608
        %v1422 = vsub.s32 0, %v1421
        %v1423 = vadd.s32 %v1418, 1
        %vm1424 = vcmp.gt.s32.totalorder %v1423, 0
        %v1425 = vsel %vm1424, %v1423, 0
        %v1426 = vshrl.u32 %v1425, 5
        %v1427 = vand.u32 %v1425, 31
        %v1428 = vsub.s32 32, %v1427
        %v1429 = vshrl.u32 683565275, %v1428
        %v1430 = vshll.u32 683565275, %v1427
        %v1431 = vshrl.u32 2475754826, %v1428
        %v1432 = vor.u32 %v1430, %v1431
        %v1433 = vshll.u32 2475754826, %v1427
        %v1434 = vshrl.u32 2131351028, %v1428
        %v1435 = vor.u32 %v1433, %v1434
        %v1436 = vshll.u32 2131351028, %v1427
        %v1437 = vshrl.u32 2102212464, %v1428
        %v1438 = vor.u32 %v1436, %v1437
        %v1439 = vshll.u32 2102212464, %v1427
        %v1440 = vshrl.u32 920167782, %v1428
        %v1441 = vor.u32 %v1439, %v1440
        %v1442 = vshll.u32 920167782, %v1427
        %v1443 = vshrl.u32 1326507024, %v1428
        %v1444 = vor.u32 %v1442, %v1443
        %vm1445 = vcmp.lt.s32.totalorder %v1426, 1
        %vm1446 = vcmp.lt.s32.totalorder %v1426, 2
        %vm1447 = vcmp.lt.s32.totalorder %v1426, 3
        %vm1448 = vcmp.lt.s32.totalorder %v1426, 4
        %v1449 = vsel %vm1445, %v1429, %v1432
        %v1450 = vsel %vm1448, %v1438, 2102212464
        %v1451 = vsel %vm1447, %v1435, %v1450
        %v1452 = vsel %vm1446, %v1449, %v1451
        %v1453 = vsel %vm1445, %v1432, %v1435
        %v1454 = vsel %vm1448, %v1441, 920167782
        %v1455 = vsel %vm1447, %v1438, %v1454
        %v1456 = vsel %vm1446, %v1453, %v1455
        %v1457 = vsel %vm1445, %v1435, %v1438
        %v1458 = vsel %vm1448, %v1444, 1326507024
        %v1459 = vsel %vm1447, %v1441, %v1458
        %v1460 = vsel %vm1446, %v1457, %v1459
        %v1461 = vshll.u32 %v1421, 8
        %v1462 = vmul.u32.u64.compose %v1461, %v1460
        %v1463 = vextract.low.u32 %v1462
        %v1464 = vextract.high.u32 %v1462
        %v1465 = vmul.u32.u64.compose %v1461, %v1456
        %v1466 = vextract.low.u32 %v1465
        %v1467 = vextract.high.u32 %v1465
        %v1468 = vmul.u32 %v1461, %v1452
        %v1469 = vadd.s32 %v1464, %v1466
        %vm1470 = vc.u32 %v1464, %v1466
        %v1471 = vadd.s32 %v1467, 1
        %v1472 = vsel %vm1470, %v1471, %v1467
        %v1473 = vadd.s32 %v1468, %v1472
        %v1474 = vadd.s32 %v1473, 536870912
        %v1475 = vshrl.u32 %v1474, 30
        %v1476 = vshll.u32 %v1475, 30
        %v1477 = vsub.s32 %v1473, %v1476
        %vm1478 = vcmp.lt.s32.totalorder %v1477, 0
        %v1479 = vsub.s32 0, %v1477
        %v1480 = vsel %vm1478, %v1479, %v1477
        %v1481 = vclz %v1480
        %v1482 = vsub.s32 %v1481, 2
        %vm1483 = vcmp.gt.s32.totalorder 0, %v1482
        %v1484 = vsel %vm1483, 0, %v1482
        %v1485 = vsub.s32 32, %v1484
        %v1486 = vshll.u32 %v1477, %v1484
        %v1487 = vshrl.u32 %v1469, %v1485
        %v1488 = vor.u32 %v1486, %v1487
        %v1489 = vsub.s32 4294967266, %v1484
        %v1490 = vadd.s32 %v1489, 127
        %v1491 = vshll.u32 %v1490, 23
        %v1492 = vor.u32 4788187, %v1491
        %v1493 = vand.u32 2147483647, %v1492
        %v1495 = vcvt.s32.f32 %v1488
        %v1496 = vmul.f32 %v1495, %v1493
        %v1497 = vxor.u32 %v1496, 2147483648
        %v1498 = vsel %vm1415, %v1497, %v1496
        %v1499 = vsub.s32 4, %v1475
        %v1500 = vsel %vm1415, %v1499, %v1475
        %v1501 = vsel %vm1414, %v1203, %v1498
        %v1502 = vsel %vm1414, 0, %v1500
        %v1503 = vcosq.f32.pop %v1501
        %v1504 = vsinq.f32.pop %v1501
        %vm1505 = vweird.f32 %v1203
        %v1506 = vadd.s32 %v1502, 3
        %v1507 = vand.u32 %v1506, 3
        %vm1508 = vcmp.lt.s32.totalorder %v1507, 2
        %vm1509 = vcmp.eq.s32.totalorder %v1507, 0
        %v1510 = vxor.u32 %v1504, 2147483648
        %v1511 = vsel %vm1509, %v1503, %v1510
        %vm1512 = vcmp.eq.s32.totalorder %v1507, 2
        %v1513 = vxor.u32 %v1503, 2147483648
        %v1514 = vsel %vm1512, %v1513, %v1504
        %v1515 = vsel %vm1508, %v1511, %v1514
        %v1516 = vsel %vm1505, nan, %v1515
        %v1517 = vand.u32 2147483647, %v1204
        %vm1518 = vcmp.le.f32.partialorder %v1517, 0.7853982
        %vm1519 = vcmp.lt.s32.totalorder %v1204, 0
        %v1520 = vand.u32 %v1204, 2139095040
        %v1521 = vshrl.u32 %v1520, 23
        %v1522 = vsub.s32 %v1521, 127
        %v1523 = vand.u32 2147483647, %v1204
        %v1524 = vand.u32 %v1523, 8388607
        %v1525 = vor.u32 %v1524, 8388608
        %v1526 = vsub.s32 0, %v1525
        %v1527 = vadd.s32 %v1522, 1
        %vm1528 = vcmp.gt.s32.totalorder %v1527, 0
        %v1529 = vsel %vm1528, %v1527, 0
        %v1530 = vshrl.u32 %v1529, 5
        %v1531 = vand.u32 %v1529, 31
        %v1532 = vsub.s32 32, %v1531
        %v1533 = vshrl.u32 683565275, %v1532
        %v1534 = vshll.u32 683565275, %v1531
        %v1535 = vshrl.u32 2475754826, %v1532
        %v1536 = vor.u32 %v1534, %v1535
        %v1537 = vshll.u32 2475754826, %v1531
        %v1538 = vshrl.u32 2131351028, %v1532
        %v1539 = vor.u32 %v1537, %v1538
        %v1540 = vshll.u32 2131351028, %v1531
        %v1541 = vshrl.u32 2102212464, %v1532
        %v1542 = vor.u32 %v1540, %v1541
        %v1543 = vshll.u32 2102212464, %v1531
        %v1544 = vshrl.u32 920167782, %v1532
        %v1545 = vor.u32 %v1543, %v1544
        %v1546 = vshll.u32 920167782, %v1531
        %v1547 = vshrl.u32 1326507024, %v1532
        %v1548 = vor.u32 %v1546, %v1547
        %vm1549 = vcmp.lt.s32.totalorder %v1530, 1
        %vm1550 = vcmp.lt.s32.totalorder %v1530, 2
        %vm1551 = vcmp.lt.s32.totalorder %v1530, 3
        %vm1552 = vcmp.lt.s32.totalorder %v1530, 4
        %v1553 = vsel %vm1549, %v1533, %v1536
        %v1554 = vsel %vm1552, %v1542, 2102212464
        %v1555 = vsel %vm1551, %v1539, %v1554
        %v1556 = vsel %vm1550, %v1553, %v1555
        %v1557 = vsel %vm1549, %v1536, %v1539
        %v1558 = vsel %vm1552, %v1545, 920167782
        %v1559 = vsel %vm1551, %v1542, %v1558
        %v1560 = vsel %vm1550, %v1557, %v1559
        %v1561 = vsel %vm1549, %v1539, %v1542
        %v1562 = vsel %vm1552, %v1548, 1326507024
        %v1563 = vsel %vm1551, %v1545, %v1562
        %v1564 = vsel %vm1550, %v1561, %v1563
        %v1565 = vshll.u32 %v1525, 8
        %v1566 = vmul.u32.u64.compose %v1565, %v1564
        %v1567 = vextract.low.u32 %v1566
        %v1568 = vextract.high.u32 %v1566
        %v1569 = vmul.u32.u64.compose %v1565, %v1560
        %v1570 = vextract.low.u32 %v1569
        %v1571 = vextract.high.u32 %v1569
        %v1572 = vmul.u32 %v1565, %v1556
        %v1573 = vadd.s32 %v1568, %v1570
        %vm1574 = vc.u32 %v1568, %v1570
        %v1575 = vadd.s32 %v1571, 1
        %v1576 = vsel %vm1574, %v1575, %v1571
        %v1577 = vadd.s32 %v1572, %v1576
        %v1578 = vadd.s32 %v1577, 536870912
        %v1579 = vshrl.u32 %v1578, 30
        %v1580 = vshll.u32 %v1579, 30
        %v1581 = vsub.s32 %v1577, %v1580
        %vm1582 = vcmp.lt.s32.totalorder %v1581, 0
        %v1583 = vsub.s32 0, %v1581
        %v1584 = vsel %vm1582, %v1583, %v1581
        %v1585 = vclz %v1584
        %v1586 = vsub.s32 %v1585, 2
        %vm1587 = vcmp.gt.s32.totalorder 0, %v1586
        %v1588 = vsel %vm1587, 0, %v1586
        %v1589 = vsub.s32 32, %v1588
        %v1590 = vshll.u32 %v1581, %v1588
        %v1591 = vshrl.u32 %v1573, %v1589
        %v1592 = vor.u32 %v1590, %v1591
        %v1593 = vsub.s32 4294967266, %v1588
        %v1594 = vadd.s32 %v1593, 127
        %v1595 = vshll.u32 %v1594, 23
        %v1596 = vor.u32 4788187, %v1595
        %v1597 = vand.u32 2147483647, %v1596
        %v1599 = vcvt.s32.f32 %v1592
        %v1600 = vmul.f32 %v1599, %v1597
        %v1601 = vxor.u32 %v1600, 2147483648
        %v1602 = vsel %vm1519, %v1601, %v1600
        %v1603 = vsub.s32 4, %v1579
        %v1604 = vsel %vm1519, %v1603, %v1579
        %v1605 = vsel %vm1518, %v1204, %v1602
        %v1606 = vsel %vm1518, 0, %v1604
        %v1607 = vcosq.f32.pop %v1605
        %v1608 = vsinq.f32.pop %v1605
        %vm1609 = vweird.f32 %v1204
        %v1610 = vadd.s32 %v1606, 3
        %v1611 = vand.u32 %v1610, 3
        %vm1612 = vcmp.lt.s32.totalorder %v1611, 2
        %vm1613 = vcmp.eq.s32.totalorder %v1611, 0
        %v1614 = vxor.u32 %v1608, 2147483648
        %v1615 = vsel %vm1613, %v1607, %v1614
        %vm1616 = vcmp.eq.s32.totalorder %v1611, 2
        %v1617 = vxor.u32 %v1607, 2147483648
        %v1618 = vsel %vm1616, %v1617, %v1608
        %v1619 = vsel %vm1612, %v1615, %v1618
        %v1620 = vsel %vm1609, nan, %v1619
        %1621 = vst [vmem:[%s273 + $0x40] sm:$0xff] %v1308
        %1622 = vst [vmem:[%s273 + $0x48] sm:$0xff] %v1412
        %1623 = vst [vmem:[%s273 + $0x50] sm:$0xff] %v1516
        %1624 = vst [vmem:[%s273 + $0x58] sm:$0xff] %v1620
        %s1625 = sand.u32 %s123, 1
        %s1626 = scalar_lea.sflag [#allocation4], %s1625
        %s1627 = sand.u32 %s123, 1
        %s1628 = smul.addr %s1627, 96
        %s1629 = scalar_lea.vmem [#allocation8], %s1628
        // Predicated region
        $region45: #{tpu_custom_call.1} parent=31 // pred_check
          %p1630 = pneg %p133
        $region46: #{tpu_custom_call.1} parent=31 // pred_check_branch
          %1632 = sbr.rel (%p1630) target = $region48
        $region47: #{tpu_custom_call.1} parent=31 // pred_region
          %s1634 = ssub.s32 1536, 1536
          %1635 = vsyncadd %s1626, %s1634
          %s1636 = smul.addr %s28, 12
          %s1637 = smul.addr %s27, 48
          %s1638 = sadd.s32 %s1636, %s1637
          %s1639 = smul.addr %s1638, 128
          %s1640 = scalar_lea.hbm %s3, %s1639
          %s1641 = sshll.u32 %s1629, 4
          %s1642 = int_to_ptr.vmem [resolvable:$true] %s1641
          %1647 = dma.vmem_to_hbm [thread:$0]  %s1642, 1536, %s1640, %s1626, 256, 256, 16
        $region48: #{tpu_custom_call.1} parent=31 // pred_fallthru
          _
      $region32: #{tpu_custom_call.1} parent=5 // pred_fallthru
        _
      %p1648 = scmp.le.s32.totalorder 2, %s18
      // Predicated region
      $region49: #{tpu_custom_call.1} parent=5 // pred_check
        %p1649 = pneg %p1648
      $region50: #{tpu_custom_call.1} parent=5 // pred_check_branch
        %1651 = sbr.rel (%p1649) target = $region52
      $region51: #{tpu_custom_call.1} parent=5 // pred_region
        %s1652 = ssub.s32 %s18, 2
        // Predicated region
        $region53: #{tpu_custom_call.1} parent=51 // pred_check
          %p1653 = pneg %p139
        $region54: #{tpu_custom_call.1} parent=51 // pred_check_branch
          %1655 = sbr.rel (%p1653) target = $region56
        $region55: #{tpu_custom_call.1} parent=51 // pred_region
          %s1656 = sand.u32 %s124, 1
          %s1657 = scalar_lea.sflag [#allocation4], %s1656
          %s1658 = sand.u32 %s124, 1
          %s1659 = smul.addr %s1658, 96
          %s1660 = scalar_lea.vmem [#allocation8], %s1659
          %1661 = dma.done %s1657, 1536
        $region56: #{tpu_custom_call.1} parent=51 // pred_fallthru
          _
      $region52: #{tpu_custom_call.1} parent=5 // pred_fallthru
        _
    $region6: #{tpu_custom_call.1} parent=1 // loop_footer
      %s22 = sadd.s32 1, %s18
    $region7: #{tpu_custom_call.1} parent=1 // loop_footer_branch
      %17 = sbr.rel target = $region3
    $region8: #{tpu_custom_call.1} parent=1 // loop_exit
      _
    %1662 = vsyncpa [#allocation3], 1
    %s1663 = scalar_lea.sflag [#allocation3], 1
    %1664 = vsyncpa %s1663, 1
    %1665 = vsyncpa [#allocation6], 1
    %s1666 = scalar_lea.sflag [#allocation6], 1
    %1667 = vsyncpa %s1666, 1
    %1668 = vsyncpa [#allocation4], 1
    %s1669 = scalar_lea.sflag [#allocation4], 1
    %1670 = vsyncpa %s1669, 1

</llo_original>
